<compile_context>
chip_gen: v7x
topology: tpu7x:2x2x1
jax: 0.10.0
libtpu: 0.0.40
codegen_flags: <defaults>
</compile_context>

<pallas_src>
import functools

import jax
import jax.numpy as jnp
from jax.experimental import pallas as pl
from jax.experimental.pallas import tpu as pltpu


# ----------------------------------------------------------------------------
# Kernel factory: one grid step == B_TILE batch elements, fully fused iAFF.
# Weight layout: w_ref[slot, :rows, :cols] = weight, w_ref[slot, :rows, K_max]
# = bias (slots: 0=fused Wg/Wx proj, 1/2=local_att, 3/4=global_att,
# 5/6=local_att2).
# ----------------------------------------------------------------------------
def _make_kernel(*, F_g, F_l, C, Ci, HW, HW_pad, K_max, B_TILE, fuse_proj):
    mask_cols = (HW_pad != HW)
    inv_hw = 1.0 / float(HW)
    PROJ, LA1, LA2, GA1, GA2, LB1, LB2 = range(7)

    def kernel(x_ref, r_ref, w_ref, o_ref):
        # Static slices out of the single packed weight ref.
        def w(slot, rows, cols):
            return w_ref[slot, :rows, :cols]

        def b(slot, r0, r1):
            return w_ref[slot, r0:r1, K_max:K_max + 1]          # (rows, 1)

        la_w1, la_b1 = w(LA1, Ci, C), b(LA1, 0, Ci)
        la_w2, la_b2 = w(LA2, C, Ci), b(LA2, 0, C)
        ga_w1, ga_b1 = w(GA1, Ci, C), b(GA1, 0, Ci)
        ga_w2, ga_b2 = w(GA2, C, Ci), b(GA2, 0, C)
        lb_w1, lb_b1 = w(LB1, Ci, C), b(LB1, 0, Ci)
        lb_w2, lb_b2 = w(LB2, C, Ci), b(LB2, 0, C)

        def mm(wt, t, bias):
            # (Cout, Cin) @ (Cin, L) on the MXU, f32 accumulation.
            return jnp.dot(wt, t, preferred_element_type=jnp.float32) + bias

        def local_att(w1, b1, w2, b2, t):
            h = jnp.maximum(mm(w1, t, b1), 0.0)                  # ReLU
            return mm(w2, h, b2)

        def global_att(t):
            # AdaptiveAvgPool2d(1) -> MLP on the pooled (C,1) column only.
            # The (C,1) result broadcasts in the xl + xg add (identical math).
            m = jnp.sum(t, axis=-1, keepdims=True) * inv_hw      # (C, 1)
            h = jnp.maximum(mm(ga_w1, m, ga_b1), 0.0)            # (Ci, 1)
            return mm(ga_w2, h, ga_b2)                           # (C, 1)

        def sigmoid(z):
            # tanh lands on the EUP slot; avoids a full-tile VPU divide.
            return 0.5 * (jnp.tanh(0.5 * z) + 1.0)

        if mask_cols:
            lane = jax.lax.broadcasted_iota(jnp.int32, (1, HW_pad), 1)
            valid = lane < HW

        # Small static unroll over the batch tile; every op stays 2-D with
        # channels on sublanes and spatial (lane-dense, multiple of 128) on
        # lanes, so the per-sample global pool is a plain lane reduction.
        for bb in range(B_TILE):
            x = x_ref[bb]                                        # (F_g, HW_pad)
            r = r_ref[bb]                                        # (F_l, HW_pad)

            if fuse_proj:
                # block_diag(Wg, Wx) @ [x; r]: one MXU pass, K = F_g + F_l.
                xr = jnp.concatenate([x, r], axis=0)
                proj = mm(w(PROJ, 2 * C, F_g + F_l), xr, b(PROJ, 0, 2 * C))
                x_ = proj[:C]
                r_ = proj[C:2 * C]
            else:
                x_ = jnp.dot(w_ref[PROJ, :C, :F_g], x,
                             preferred_element_type=jnp.float32) + b(PROJ, 0, C)
                r_ = jnp.dot(w_ref[PROJ, C:2 * C, F_g:F_g + F_l], r,
                             preferred_element_type=jnp.float32) + b(PROJ, C, 2 * C)

            if mask_cols:
                # Zero the padded lanes so the global average pool (sum/HW)
                # and the final output stay exact.
                x_ = jnp.where(valid, x_, 0.0)
                r_ = jnp.where(valid, r_, 0.0)

            xa = x_ + r_
            wei = sigmoid(local_att(la_w1, la_b1, la_w2, la_b2, xa)
                          + global_att(xa))
            xi = x_ * wei + r_ * (1.0 - wei)

            # PyTorch forward reuses global_att (NOT global_att2) -- reproduced.
            wei2 = sigmoid(local_att(lb_w1, lb_b1, lb_w2, lb_b2, xi)
                           + global_att(xi))
            xo = x_ * wei2 + r_ * (1.0 - wei2)

            o_ref[bb] = xo.astype(o_ref.dtype)

    return kernel


# ----------------------------------------------------------------------------
# Wrapper
# ----------------------------------------------------------------------------
def _choose_b_tile(n, hw_pad):
    # Fatten grid steps (amortize ~0.35us/step + pipeline setup) but keep at
    # least 2 grid steps when the batch allows (pipeline overlap / v7x TCs).
    target = max(1, 1024 // max(hw_pad, 1))
    best = 1
    for cand in range(1, min(n, target) + 1):
        if n % cand == 0 and n // cand >= 2:
            best = cand
    return best


def iaff_forward(w_pack, cfg, x_nchw, r_nchw, *, b_tile=None):
    N, F_g, H, W = x_nchw.shape
    F_l = r_nchw.shape[1]
    C, Ci, K_max = cfg["C"], cfg["Ci"], cfg["K_max"]
    assert F_g == cfg["F_g"] and F_l == cfg["F_l"]

    HW = H * W
    HW_pad = ((HW + 127) // 128) * 128                 # lane-dense (unmasked vst)

    x = x_nchw.reshape(N, F_g, HW)
    r = r_nchw.reshape(N, F_l, HW)
    if HW_pad != HW:
        x = jnp.pad(x, ((0, 0), (0, 0), (0, HW_pad - HW)))
        r = jnp.pad(r, ((0, 0), (0, 0), (0, HW_pad - HW)))

    if b_tile is None:
        b_tile = _choose_b_tile(N, HW_pad)
    n_pad = ((N + b_tile - 1) // b_tile) * b_tile
    if n_pad != N:
        x = jnp.pad(x, ((0, n_pad - N), (0, 0), (0, 0)))
        r = jnp.pad(r, ((0, n_pad - N), (0, 0), (0, 0)))
    steps = n_pad // b_tile

    kernel = _make_kernel(
        F_g=F_g, F_l=F_l, C=C, Ci=Ci, HW=HW, HW_pad=HW_pad, K_max=K_max,
        B_TILE=b_tile, fuse_proj=(F_g % 8 == 0 and F_l % 8 == 0))

    out = pl.pallas_call(
        kernel,
        out_shape=jax.ShapeDtypeStruct((n_pad, C, HW_pad), x_nchw.dtype),
        grid_spec=pltpu.PrefetchScalarGridSpec(
            num_scalar_prefetch=0,
            grid=(steps,),
            in_specs=[
                pl.BlockSpec((b_tile, F_g, HW_pad), lambda i: (i, 0, 0)),
                pl.BlockSpec((b_tile, F_l, HW_pad), lambda i: (i, 0, 0)),
                pl.BlockSpec(w_pack.shape, lambda i: (0, 0, 0)),  # DMA'd once
            ],
            out_specs=pl.BlockSpec((b_tile, C, HW_pad), lambda i: (i, 0, 0)),
        ),
        compiler_params=pltpu.CompilerParams(
            dimension_semantics=("parallel",),          # shard batch steps over TCs
            vmem_limit_bytes=32 * 1024 * 1024,          # >v5e default, <v7x 64MiB
        ),
    )(x, r, w_pack)

    out = out[:N, :, :HW]
    return out.reshape(N, C, H, W)


# ----------------------------------------------------------------------------
# Parameter construction: Conv1x1 + BatchNorm (eval / running stats) folded
# into a single affine (W_eff, b_eff) per layer, then packed into one array.
# ----------------------------------------------------------------------------
def _fold_conv_bn(key, cin, cout, eps=1e-5):
    ks = jax.random.split(key, 6)
    w = jax.random.normal(ks[0], (cout, cin), jnp.float32) * (1.0 / (cin ** 0.5))
    b = jax.random.normal(ks[1], (cout,), jnp.float32) * 0.1
    gamma = 1.0 + 0.1 * jax.random.normal(ks[2], (cout,), jnp.float32)
    beta = 0.1 * jax.random.normal(ks[3], (cout,), jnp.float32)
    run_mean = 0.1 * jax.random.normal(ks[4], (cout,), jnp.float32)
    run_var = jnp.abs(jax.random.normal(ks[5], (cout,), jnp.float32)) + 0.5
    s = gamma / jnp.sqrt(run_var + eps)
    w_eff = w * s[:, None]
    b_eff = (b - run_mean) * s + beta
    return w_eff, b_eff.reshape(cout, 1)


def init_iaff_params(key, F_g, F_l, F_int):
    C = F_int
    Ci = C // 4                                    # r = 4
    assert Ci >= 1
    keys = jax.random.split(key, 8)
    p = {}
    p['wg'], p['bg'] = _fold_conv_bn(keys[0], F_g, C)         # W_g
    p['wx'], p['bx'] = _fold_conv_bn(keys[1], F_l, C)         # W_x
    p['la_w1'], p['la_b1'] = _fold_conv_bn(keys[2], C, Ci)    # local_att
    p['la_w2'], p['la_b2'] = _fold_conv_bn(keys[3], Ci, C)
    p['ga_w1'], p['ga_b1'] = _fold_conv_bn(keys[4], C, Ci)    # global_att
    p['ga_w2'], p['ga_b2'] = _fold_conv_bn(keys[5], Ci, C)
    p['la2_w1'], p['la2_b1'] = _fold_conv_bn(keys[6], C, Ci)  # local_att2
    p['la2_w2'], p['la2_b2'] = _fold_conv_bn(keys[7], Ci, C)
    # TODO(synk): global_att2 params exist in the PyTorch module but its
    # forward never uses them (it calls global_att twice), so none are created.
    return p


def pack_iaff_params(p, F_g, F_l, F_int):
    """Pack all folded weights+biases into one (7, R_max, K_max+1) array."""
    C = F_int
    Ci = C // 4
    K_max = max(F_g + F_l, C, Ci)
    R_max = max(2 * C, C, Ci)

    # Slot 0: block_diag(Wg, Wx) so both projections run as one matmul.
    w_proj = jnp.zeros((2 * C, F_g + F_l), jnp.float32)
    w_proj = w_proj.at[:C, :F_g].set(p['wg'])
    w_proj = w_proj.at[C:, F_g:].set(p['wx'])
    b_proj = jnp.concatenate([p['bg'], p['bx']], axis=0)      # (2C, 1)

    layers = [
        (w_proj, b_proj),
        (p['la_w1'], p['la_b1']), (p['la_w2'], p['la_b2']),
        (p['ga_w1'], p['ga_b1']), (p['ga_w2'], p['ga_b2']),
        (p['la2_w1'], p['la2_b1']), (p['la2_w2'], p['la2_b2']),
    ]
    pack = jnp.zeros((len(layers), R_max, K_max + 1), jnp.float32)
    for k, (wk, bk) in enumerate(layers):
        pack = pack.at[k, :wk.shape[0], :wk.shape[1]].set(wk)
        pack = pack.at[k, :bk.shape[0], K_max].set(bk[:, 0])
    cfg = dict(F_g=F_g, F_l=F_l, C=C, Ci=Ci, K_max=K_max)
    return pack, cfg


# ----------------------------------------------------------------------------
# Pure-JAX reference (same folded params) for a numerical sanity check.
# ----------------------------------------------------------------------------
def iaff_reference(params, x_nchw, r_nchw):
    N, F_g, H, W = x_nchw.shape
    x = x_nchw.reshape(N, F_g, H * W)
    r = r_nchw.reshape(N, r_nchw.shape[1], H * W)

    def conv(w, b, t):
        return jnp.einsum('oi,nil->nol', w, t) + b[None]

    def local_att(pre, t):
        h = jnp.maximum(conv(params[pre + '_w1'], params[pre + '_b1'], t), 0.0)
        return conv(params[pre + '_w2'], params[pre + '_b2'], h)

    def global_att(pre, t):
        m = jnp.mean(t, axis=-1, keepdims=True)
        h = jnp.maximum(conv(params[pre + '_w1'], params[pre + '_b1'], m), 0.0)
        return conv(params[pre + '_w2'], params[pre + '_b2'], h)

    sigmoid = jax.nn.sigmoid

    x_ = conv(params['wg'], params['bg'], x)
    r_ = conv(params['wx'], params['bx'], r)
    xa = x_ + r_
    wei = sigmoid(local_att('la', xa) + global_att('ga', xa))
    xi = x_ * wei + r_ * (1.0 - wei)
    wei2 = sigmoid(local_att('la2', xi) + global_att('ga', xi))
    xo = x_ * wei2 + r_ * (1.0 - wei2)
    return xo.reshape(N, -1, H, W)


if __name__ == "__main__":
    key = jax.random.PRNGKey(0)
    kx, kr, kp = jax.random.split(key, 3)

    # Small shapes consistent with the module: F_g/F_l input channels, F_int
    # fused channels, 16x16 spatial.  Batch 4 so the batch-tiled grid
    # (B_TILE=2, 2 steps) is actually exercised.
    N, H, W = 4, 16, 16
    F_g, F_l, F_int = 8, 8, 16

    x = jax.random.normal(kx, (N, F_g, H, W), jnp.float32)
    residual = jax.random.normal(kr, (N, F_l, H, W), jnp.float32)

    params = init_iaff_params(kp, F_g, F_l, F_int)
    w_pack, cfg = pack_iaff_params(params, F_g, F_l, F_int)

    fwd = jax.jit(functools.partial(iaff_forward, w_pack, cfg))
    out = fwd(x, residual)
    jax.block_until_ready(out)

    assert out.shape == (N, F_int, H, W), out.shape
    assert out.dtype == jnp.float32

    ref = iaff_reference(params, x, residual)
    max_err = float(jnp.max(jnp.abs(out - ref)))
    assert max_err < 1e-3, f"max abs err {max_err}"

    print("KERNEL_OK")
</pallas_src>

<mosaic_0001>
module attributes {stable_mosaic.version = 11 : i64} {
  func.func @kernel(%arg0: i32, %arg1: memref<2x8x256xf32, #tpu.memory_space<vmem>>, %arg2: memref<2x8x256xf32, #tpu.memory_space<vmem>>, %arg3: memref<7x32x17xf32, #tpu.memory_space<vmem>>, %arg4: memref<2x16x256xf32, #tpu.memory_space<vmem>>) attributes {dimension_semantics = [#tpu.dimension_semantics<parallel>], iteration_bounds = array<i64: 2>, scalar_prefetch = 0 : i64, scratch_operands = 0 : i64, tpu.core_type = #tpu.core_type<tc>, window_params = [{transform_indices = @transform_0, window_bounds = array<i64: 2, 8, 256>}, {transform_indices = @transform_1, window_bounds = array<i64: 2, 8, 256>}, {pipeline_mode = #tpu.pipeline_mode<synchronous>, transform_indices = @transform_2, window_bounds = array<i64: 7, 32, 17>}, {transform_indices = @transform_3, window_bounds = array<i64: 2, 16, 256>}]} {
    %c1 = arith.constant 1 : index
    %c0 = arith.constant 0 : index
    %c0_0 = arith.constant 0 : index
    %0 = vector.load %arg3[%c1, %c0, %c0_0] : memref<7x32x17xf32, #tpu.memory_space<vmem>>, vector<1x4x16xf32>
    %1 = vector.shape_cast %0 : vector<1x4x16xf32> to vector<4x16xf32>
    %c1_1 = arith.constant 1 : index
    %c0_2 = arith.constant 0 : index
    %c16 = arith.constant 16 : index
    %2 = vector.load %arg3[%c1_1, %c0_2, %c16] : memref<7x32x17xf32, #tpu.memory_space<vmem>>, vector<1x4x1xf32>
    %3 = vector.shape_cast %2 : vector<1x4x1xf32> to vector<4x1xf32>
    %c2 = arith.constant 2 : index
    %c0_3 = arith.constant 0 : index
    %c0_4 = arith.constant 0 : index
    %4 = vector.load %arg3[%c2, %c0_3, %c0_4] : memref<7x32x17xf32, #tpu.memory_space<vmem>>, vector<1x16x4xf32>
    %5 = vector.shape_cast %4 : vector<1x16x4xf32> to vector<16x4xf32>
    %c2_5 = arith.constant 2 : index
    %c0_6 = arith.constant 0 : index
    %c16_7 = arith.constant 16 : index
    %6 = vector.load %arg3[%c2_5, %c0_6, %c16_7] : memref<7x32x17xf32, #tpu.memory_space<vmem>>, vector<1x16x1xf32>
    %7 = vector.shape_cast %6 : vector<1x16x1xf32> to vector<16x1xf32>
    %c3 = arith.constant 3 : index
    %c0_8 = arith.constant 0 : index
    %c0_9 = arith.constant 0 : index
    %8 = vector.load %arg3[%c3, %c0_8, %c0_9] : memref<7x32x17xf32, #tpu.memory_space<vmem>>, vector<1x4x16xf32>
    %9 = vector.shape_cast %8 : vector<1x4x16xf32> to vector<4x16xf32>
    %c3_10 = arith.constant 3 : index
    %c0_11 = arith.constant 0 : index
    %c16_12 = arith.constant 16 : index
    %10 = vector.load %arg3[%c3_10, %c0_11, %c16_12] : memref<7x32x17xf32, #tpu.memory_space<vmem>>, vector<1x4x1xf32>
    %11 = vector.shape_cast %10 : vector<1x4x1xf32> to vector<4x1xf32>
    %c4 = arith.constant 4 : index
    %c0_13 = arith.constant 0 : index
    %c0_14 = arith.constant 0 : index
    %12 = vector.load %arg3[%c4, %c0_13, %c0_14] : memref<7x32x17xf32, #tpu.memory_space<vmem>>, vector<1x16x4xf32>
    %13 = vector.shape_cast %12 : vector<1x16x4xf32> to vector<16x4xf32>
    %c4_15 = arith.constant 4 : index
    %c0_16 = arith.constant 0 : index
    %c16_17 = arith.constant 16 : index
    %14 = vector.load %arg3[%c4_15, %c0_16, %c16_17] : memref<7x32x17xf32, #tpu.memory_space<vmem>>, vector<1x16x1xf32>
    %15 = vector.shape_cast %14 : vector<1x16x1xf32> to vector<16x1xf32>
    %c5 = arith.constant 5 : index
    %c0_18 = arith.constant 0 : index
    %c0_19 = arith.constant 0 : index
    %16 = vector.load %arg3[%c5, %c0_18, %c0_19] : memref<7x32x17xf32, #tpu.memory_space<vmem>>, vector<1x4x16xf32>
    %17 = vector.shape_cast %16 : vector<1x4x16xf32> to vector<4x16xf32>
    %c5_20 = arith.constant 5 : index
    %c0_21 = arith.constant 0 : index
    %c16_22 = arith.constant 16 : index
    %18 = vector.load %arg3[%c5_20, %c0_21, %c16_22] : memref<7x32x17xf32, #tpu.memory_space<vmem>>, vector<1x4x1xf32>
    %19 = vector.shape_cast %18 : vector<1x4x1xf32> to vector<4x1xf32>
    %c6 = arith.constant 6 : index
    %c0_23 = arith.constant 0 : index
    %c0_24 = arith.constant 0 : index
    %20 = vector.load %arg3[%c6, %c0_23, %c0_24] : memref<7x32x17xf32, #tpu.memory_space<vmem>>, vector<1x16x4xf32>
    %21 = vector.shape_cast %20 : vector<1x16x4xf32> to vector<16x4xf32>
    %c6_25 = arith.constant 6 : index
    %c0_26 = arith.constant 0 : index
    %c16_27 = arith.constant 16 : index
    %22 = vector.load %arg3[%c6_25, %c0_26, %c16_27] : memref<7x32x17xf32, #tpu.memory_space<vmem>>, vector<1x16x1xf32>
    %23 = vector.shape_cast %22 : vector<1x16x1xf32> to vector<16x1xf32>
    %c0_28 = arith.constant 0 : index
    %c0_29 = arith.constant 0 : index
    %c0_30 = arith.constant 0 : index
    %24 = vector.load %arg1[%c0_28, %c0_29, %c0_30] : memref<2x8x256xf32, #tpu.memory_space<vmem>>, vector<1x8x256xf32>
    %25 = vector.shape_cast %24 : vector<1x8x256xf32> to vector<8x256xf32>
    %c0_31 = arith.constant 0 : index
    %c0_32 = arith.constant 0 : index
    %c0_33 = arith.constant 0 : index
    %26 = vector.load %arg2[%c0_31, %c0_32, %c0_33] : memref<2x8x256xf32, #tpu.memory_space<vmem>>, vector<1x8x256xf32>
    %27 = vector.shape_cast %26 : vector<1x8x256xf32> to vector<8x256xf32>
    %28 = tpu.concatenate %25, %27 in 0 : vector<8x256xf32>, vector<8x256xf32> -> vector<16x256xf32>
    %c0_34 = arith.constant 0 : index
    %c0_35 = arith.constant 0 : index
    %c0_36 = arith.constant 0 : index
    %29 = vector.load %arg3[%c0_34, %c0_35, %c0_36] : memref<7x32x17xf32, #tpu.memory_space<vmem>>, vector<1x32x16xf32>
    %30 = vector.shape_cast %29 : vector<1x32x16xf32> to vector<32x16xf32>
    %c0_37 = arith.constant 0 : index
    %c0_38 = arith.constant 0 : index
    %c16_39 = arith.constant 16 : index
    %31 = vector.load %arg3[%c0_37, %c0_38, %c16_39] : memref<7x32x17xf32, #tpu.memory_space<vmem>>, vector<1x32x1xf32>
    %32 = vector.shape_cast %31 : vector<1x32x1xf32> to vector<32x1xf32>
    %cst = arith.constant dense<0.000000e+00> : vector<32x256xf32>
    %33 = tpu.matmul %30, %28, %cst {dimension_numbers = #tpu.dot_dimension_numbers<[1], [0], [0], [1], [0, 0, 1, 1], [], []>} : vector<32x16xf32>, vector<16x256xf32>, vector<32x256xf32> -> vector<32x256xf32>
    %34 = vector.broadcast %32 : vector<32x1xf32> to vector<32x256xf32>
    %35 = arith.addf %33, %34 : vector<32x256xf32>
    %36 = vector.extract_strided_slice %35 {offsets = [0, 0], sizes = [16, 256], strides = [1, 1]} : vector<32x256xf32> to vector<16x256xf32>
    %37 = vector.extract_strided_slice %35 {offsets = [16, 0], sizes = [16, 256], strides = [1, 1]} : vector<32x256xf32> to vector<16x256xf32>
    %38 = arith.addf %36, %37 : vector<16x256xf32>
    %cst_40 = arith.constant dense<0.000000e+00> : vector<4x256xf32>
    %39 = tpu.matmul %1, %38, %cst_40 {dimension_numbers = #tpu.dot_dimension_numbers<[1], [0], [0], [1], [0, 0, 1, 1], [], []>} : vector<4x16xf32>, vector<16x256xf32>, vector<4x256xf32> -> vector<4x256xf32>
    %40 = vector.broadcast %3 : vector<4x1xf32> to vector<4x256xf32>
    %41 = arith.addf %39, %40 : vector<4x256xf32>
    %cst_41 = arith.constant 0.000000e+00 : f32
    %42 = vector.broadcast %cst_41 : f32 to vector<4x256xf32>
    %43 = arith.maximumf %41, %42 : vector<4x256xf32>
    %cst_42 = arith.constant dense<0.000000e+00> : vector<16x256xf32>
    %44 = tpu.matmul %5, %43, %cst_42 {dimension_numbers = #tpu.dot_dimension_numbers<[1], [0], [0], [1], [0, 0, 1, 1], [], []>} : vector<16x4xf32>, vector<4x256xf32>, vector<16x256xf32> -> vector<16x256xf32>
    %45 = vector.broadcast %7 : vector<16x1xf32> to vector<16x256xf32>
    %46 = arith.addf %44, %45 : vector<16x256xf32>
    %cst_43 = arith.constant dense<0.000000e+00> : vector<16xf32>
    %47 = vector.multi_reduction <add>, %38, %cst_43 [1] : vector<16x256xf32> to vector<16xf32>
    %48 = vector.shape_cast %47 : vector<16xf32> to vector<16x1xf32>
    %cst_44 = arith.constant 3.906250e-03 : f32
    %49 = vector.broadcast %cst_44 : f32 to vector<16x1xf32>
    %50 = arith.mulf %48, %49 : vector<16x1xf32>
    %cst_45 = arith.constant dense<0.000000e+00> : vector<4x1xf32>
    %51 = tpu.matmul %9, %50, %cst_45 {dimension_numbers = #tpu.dot_dimension_numbers<[1], [0], [0], [1], [0, 0, 1, 1], [], []>} : vector<4x16xf32>, vector<16x1xf32>, vector<4x1xf32> -> vector<4x1xf32>
    %52 = arith.addf %51, %11 : vector<4x1xf32>
    %cst_46 = arith.constant 0.000000e+00 : f32
    %53 = vector.broadcast %cst_46 : f32 to vector<4x1xf32>
    %54 = arith.maximumf %52, %53 : vector<4x1xf32>
    %cst_47 = arith.constant dense<0.000000e+00> : vector<16x1xf32>
    %55 = tpu.matmul %13, %54, %cst_47 {dimension_numbers = #tpu.dot_dimension_numbers<[1], [0], [0], [1], [0, 0, 1, 1], [], []>} : vector<16x4xf32>, vector<4x1xf32>, vector<16x1xf32> -> vector<16x1xf32>
    %56 = arith.addf %55, %15 : vector<16x1xf32>
    %57 = vector.broadcast %56 : vector<16x1xf32> to vector<16x256xf32>
    %58 = arith.addf %46, %57 : vector<16x256xf32>
    %cst_48 = arith.constant 5.000000e-01 : f32
    %59 = vector.broadcast %cst_48 : f32 to vector<16x256xf32>
    %60 = arith.mulf %59, %58 : vector<16x256xf32>
    %61 = math.tanh %60 : vector<16x256xf32>
    %cst_49 = arith.constant 1.000000e+00 : f32
    %62 = vector.broadcast %cst_49 : f32 to vector<16x256xf32>
    %63 = arith.addf %61, %62 : vector<16x256xf32>
    %cst_50 = arith.constant 5.000000e-01 : f32
    %64 = vector.broadcast %cst_50 : f32 to vector<16x256xf32>
    %65 = arith.mulf %64, %63 : vector<16x256xf32>
    %66 = arith.mulf %36, %65 : vector<16x256xf32>
    %cst_51 = arith.constant 1.000000e+00 : f32
    %67 = vector.broadcast %cst_51 : f32 to vector<16x256xf32>
    %68 = arith.subf %67, %65 : vector<16x256xf32>
    %69 = arith.mulf %37, %68 : vector<16x256xf32>
    %70 = arith.addf %66, %69 : vector<16x256xf32>
    %cst_52 = arith.constant dense<0.000000e+00> : vector<4x256xf32>
    %71 = tpu.matmul %17, %70, %cst_52 {dimension_numbers = #tpu.dot_dimension_numbers<[1], [0], [0], [1], [0, 0, 1, 1], [], []>} : vector<4x16xf32>, vector<16x256xf32>, vector<4x256xf32> -> vector<4x256xf32>
    %72 = vector.broadcast %19 : vector<4x1xf32> to vector<4x256xf32>
    %73 = arith.addf %71, %72 : vector<4x256xf32>
    %cst_53 = arith.constant 0.000000e+00 : f32
    %74 = vector.broadcast %cst_53 : f32 to vector<4x256xf32>
    %75 = arith.maximumf %73, %74 : vector<4x256xf32>
    %cst_54 = arith.constant dense<0.000000e+00> : vector<16x256xf32>
    %76 = tpu.matmul %21, %75, %cst_54 {dimension_numbers = #tpu.dot_dimension_numbers<[1], [0], [0], [1], [0, 0, 1, 1], [], []>} : vector<16x4xf32>, vector<4x256xf32>, vector<16x256xf32> -> vector<16x256xf32>
    %77 = vector.broadcast %23 : vector<16x1xf32> to vector<16x256xf32>
    %78 = arith.addf %76, %77 : vector<16x256xf32>
    %cst_55 = arith.constant dense<0.000000e+00> : vector<16xf32>
    %79 = vector.multi_reduction <add>, %70, %cst_55 [1] : vector<16x256xf32> to vector<16xf32>
    %80 = vector.shape_cast %79 : vector<16xf32> to vector<16x1xf32>
    %cst_56 = arith.constant 3.906250e-03 : f32
    %81 = vector.broadcast %cst_56 : f32 to vector<16x1xf32>
    %82 = arith.mulf %80, %81 : vector<16x1xf32>
    %cst_57 = arith.constant dense<0.000000e+00> : vector<4x1xf32>
    %83 = tpu.matmul %9, %82, %cst_57 {dimension_numbers = #tpu.dot_dimension_numbers<[1], [0], [0], [1], [0, 0, 1, 1], [], []>} : vector<4x16xf32>, vector<16x1xf32>, vector<4x1xf32> -> vector<4x1xf32>
    %84 = arith.addf %83, %11 : vector<4x1xf32>
    %cst_58 = arith.constant 0.000000e+00 : f32
    %85 = vector.broadcast %cst_58 : f32 to vector<4x1xf32>
    %86 = arith.maximumf %84, %85 : vector<4x1xf32>
    %cst_59 = arith.constant dense<0.000000e+00> : vector<16x1xf32>
    %87 = tpu.matmul %13, %86, %cst_59 {dimension_numbers = #tpu.dot_dimension_numbers<[1], [0], [0], [1], [0, 0, 1, 1], [], []>} : vector<16x4xf32>, vector<4x1xf32>, vector<16x1xf32> -> vector<16x1xf32>
    %88 = arith.addf %87, %15 : vector<16x1xf32>
    %89 = vector.broadcast %88 : vector<16x1xf32> to vector<16x256xf32>
    %90 = arith.addf %78, %89 : vector<16x256xf32>
    %cst_60 = arith.constant 5.000000e-01 : f32
    %91 = vector.broadcast %cst_60 : f32 to vector<16x256xf32>
    %92 = arith.mulf %91, %90 : vector<16x256xf32>
    %93 = math.tanh %92 : vector<16x256xf32>
    %cst_61 = arith.constant 1.000000e+00 : f32
    %94 = vector.broadcast %cst_61 : f32 to vector<16x256xf32>
    %95 = arith.addf %93, %94 : vector<16x256xf32>
    %cst_62 = arith.constant 5.000000e-01 : f32
    %96 = vector.broadcast %cst_62 : f32 to vector<16x256xf32>
    %97 = arith.mulf %96, %95 : vector<16x256xf32>
    %98 = arith.mulf %36, %97 : vector<16x256xf32>
    %cst_63 = arith.constant 1.000000e+00 : f32
    %99 = vector.broadcast %cst_63 : f32 to vector<16x256xf32>
    %100 = arith.subf %99, %97 : vector<16x256xf32>
    %101 = arith.mulf %37, %100 : vector<16x256xf32>
    %102 = arith.addf %98, %101 : vector<16x256xf32>
    %c0_64 = arith.constant 0 : index
    %c0_65 = arith.constant 0 : index
    %c0_66 = arith.constant 0 : index
    %103 = vector.load %arg4[%c0_64, %c0_65, %c0_66] : memref<2x16x256xf32, #tpu.memory_space<vmem>>, vector<1x16x256xf32>
    %104 = vector.shape_cast %103 : vector<1x16x256xf32> to vector<16x256xf32>
    %105 = vector.shape_cast %102 : vector<16x256xf32> to vector<1x16x256xf32>
    tpu.vector_store %arg4[%c0_64, %c0_65, %c0_66], %105 {strides = array<i32>} : memref<2x16x256xf32, #tpu.memory_space<vmem>>, vector<1x16x256xf32>,
    %c1_67 = arith.constant 1 : index
    %c0_68 = arith.constant 0 : index
    %c0_69 = arith.constant 0 : index
    %106 = vector.load %arg1[%c1_67, %c0_68, %c0_69] : memref<2x8x256xf32, #tpu.memory_space<vmem>>, vector<1x8x256xf32>
    %107 = vector.shape_cast %106 : vector<1x8x256xf32> to vector<8x256xf32>
    %c1_70 = arith.constant 1 : index
    %c0_71 = arith.constant 0 : index
    %c0_72 = arith.constant 0 : index
    %108 = vector.load %arg2[%c1_70, %c0_71, %c0_72] : memref<2x8x256xf32, #tpu.memory_space<vmem>>, vector<1x8x256xf32>
    %109 = vector.shape_cast %108 : vector<1x8x256xf32> to vector<8x256xf32>
    %110 = tpu.concatenate %107, %109 in 0 : vector<8x256xf32>, vector<8x256xf32> -> vector<16x256xf32>
    %c0_73 = arith.constant 0 : index
    %c0_74 = arith.constant 0 : index
    %c0_75 = arith.constant 0 : index
    %111 = vector.load %arg3[%c0_73, %c0_74, %c0_75] : memref<7x32x17xf32, #tpu.memory_space<vmem>>, vector<1x32x16xf32>
    %112 = vector.shape_cast %111 : vector<1x32x16xf32> to vector<32x16xf32>
    %c0_76 = arith.constant 0 : index
    %c0_77 = arith.constant 0 : index
    %c16_78 = arith.constant 16 : index
    %113 = vector.load %arg3[%c0_76, %c0_77, %c16_78] : memref<7x32x17xf32, #tpu.memory_space<vmem>>, vector<1x32x1xf32>
    %114 = vector.shape_cast %113 : vector<1x32x1xf32> to vector<32x1xf32>
    %cst_79 = arith.constant dense<0.000000e+00> : vector<32x256xf32>
    %115 = tpu.matmul %112, %110, %cst_79 {dimension_numbers = #tpu.dot_dimension_numbers<[1], [0], [0], [1], [0, 0, 1, 1], [], []>} : vector<32x16xf32>, vector<16x256xf32>, vector<32x256xf32> -> vector<32x256xf32>
    %116 = vector.broadcast %114 : vector<32x1xf32> to vector<32x256xf32>
    %117 = arith.addf %115, %116 : vector<32x256xf32>
    %118 = vector.extract_strided_slice %117 {offsets = [0, 0], sizes = [16, 256], strides = [1, 1]} : vector<32x256xf32> to vector<16x256xf32>
    %119 = vector.extract_strided_slice %117 {offsets = [16, 0], sizes = [16, 256], strides = [1, 1]} : vector<32x256xf32> to vector<16x256xf32>
    %120 = arith.addf %118, %119 : vector<16x256xf32>
    %cst_80 = arith.constant dense<0.000000e+00> : vector<4x256xf32>
    %121 = tpu.matmul %1, %120, %cst_80 {dimension_numbers = #tpu.dot_dimension_numbers<[1], [0], [0], [1], [0, 0, 1, 1], [], []>} : vector<4x16xf32>, vector<16x256xf32>, vector<4x256xf32> -> vector<4x256xf32>
    %122 = vector.broadcast %3 : vector<4x1xf32> to vector<4x256xf32>
    %123 = arith.addf %121, %122 : vector<4x256xf32>
    %cst_81 = arith.constant 0.000000e+00 : f32
    %124 = vector.broadcast %cst_81 : f32 to vector<4x256xf32>
    %125 = arith.maximumf %123, %124 : vector<4x256xf32>
    %cst_82 = arith.constant dense<0.000000e+00> : vector<16x256xf32>
    %126 = tpu.matmul %5, %125, %cst_82 {dimension_numbers = #tpu.dot_dimension_numbers<[1], [0], [0], [1], [0, 0, 1, 1], [], []>} : vector<16x4xf32>, vector<4x256xf32>, vector<16x256xf32> -> vector<16x256xf32>
    %127 = vector.broadcast %7 : vector<16x1xf32> to vector<16x256xf32>
    %128 = arith.addf %126, %127 : vector<16x256xf32>
    %cst_83 = arith.constant dense<0.000000e+00> : vector<16xf32>
    %129 = vector.multi_reduction <add>, %120, %cst_83 [1] : vector<16x256xf32> to vector<16xf32>
    %130 = vector.shape_cast %129 : vector<16xf32> to vector<16x1xf32>
    %cst_84 = arith.constant 3.906250e-03 : f32
    %131 = vector.broadcast %cst_84 : f32 to vector<16x1xf32>
    %132 = arith.mulf %130, %131 : vector<16x1xf32>
    %cst_85 = arith.constant dense<0.000000e+00> : vector<4x1xf32>
    %133 = tpu.matmul %9, %132, %cst_85 {dimension_numbers = #tpu.dot_dimension_numbers<[1], [0], [0], [1], [0, 0, 1, 1], [], []>} : vector<4x16xf32>, vector<16x1xf32>, vector<4x1xf32> -> vector<4x1xf32>
    %134 = arith.addf %133, %11 : vector<4x1xf32>
    %cst_86 = arith.constant 0.000000e+00 : f32
    %135 = vector.broadcast %cst_86 : f32 to vector<4x1xf32>
    %136 = arith.maximumf %134, %135 : vector<4x1xf32>
    %cst_87 = arith.constant dense<0.000000e+00> : vector<16x1xf32>
    %137 = tpu.matmul %13, %136, %cst_87 {dimension_numbers = #tpu.dot_dimension_numbers<[1], [0], [0], [1], [0, 0, 1, 1], [], []>} : vector<16x4xf32>, vector<4x1xf32>, vector<16x1xf32> -> vector<16x1xf32>
    %138 = arith.addf %137, %15 : vector<16x1xf32>
    %139 = vector.broadcast %138 : vector<16x1xf32> to vector<16x256xf32>
    %140 = arith.addf %128, %139 : vector<16x256xf32>
    %cst_88 = arith.constant 5.000000e-01 : f32
    %141 = vector.broadcast %cst_88 : f32 to vector<16x256xf32>
    %142 = arith.mulf %141, %140 : vector<16x256xf32>
    %143 = math.tanh %142 : vector<16x256xf32>
    %cst_89 = arith.constant 1.000000e+00 : f32
    %144 = vector.broadcast %cst_89 : f32 to vector<16x256xf32>
    %145 = arith.addf %143, %144 : vector<16x256xf32>
    %cst_90 = arith.constant 5.000000e-01 : f32
    %146 = vector.broadcast %cst_90 : f32 to vector<16x256xf32>
    %147 = arith.mulf %146, %145 : vector<16x256xf32>
    %148 = arith.mulf %118, %147 : vector<16x256xf32>
    %cst_91 = arith.constant 1.000000e+00 : f32
    %149 = vector.broadcast %cst_91 : f32 to vector<16x256xf32>
    %150 = arith.subf %149, %147 : vector<16x256xf32>
    %151 = arith.mulf %119, %150 : vector<16x256xf32>
    %152 = arith.addf %148, %151 : vector<16x256xf32>
    %cst_92 = arith.constant dense<0.000000e+00> : vector<4x256xf32>
    %153 = tpu.matmul %17, %152, %cst_92 {dimension_numbers = #tpu.dot_dimension_numbers<[1], [0], [0], [1], [0, 0, 1, 1], [], []>} : vector<4x16xf32>, vector<16x256xf32>, vector<4x256xf32> -> vector<4x256xf32>
    %154 = vector.broadcast %19 : vector<4x1xf32> to vector<4x256xf32>
    %155 = arith.addf %153, %154 : vector<4x256xf32>
    %cst_93 = arith.constant 0.000000e+00 : f32
    %156 = vector.broadcast %cst_93 : f32 to vector<4x256xf32>
    %157 = arith.maximumf %155, %156 : vector<4x256xf32>
    %cst_94 = arith.constant dense<0.000000e+00> : vector<16x256xf32>
    %158 = tpu.matmul %21, %157, %cst_94 {dimension_numbers = #tpu.dot_dimension_numbers<[1], [0], [0], [1], [0, 0, 1, 1], [], []>} : vector<16x4xf32>, vector<4x256xf32>, vector<16x256xf32> -> vector<16x256xf32>
    %159 = vector.broadcast %23 : vector<16x1xf32> to vector<16x256xf32>
    %160 = arith.addf %158, %159 : vector<16x256xf32>
    %cst_95 = arith.constant dense<0.000000e+00> : vector<16xf32>
    %161 = vector.multi_reduction <add>, %152, %cst_95 [1] : vector<16x256xf32> to vector<16xf32>
    %162 = vector.shape_cast %161 : vector<16xf32> to vector<16x1xf32>
    %cst_96 = arith.constant 3.906250e-03 : f32
    %163 = vector.broadcast %cst_96 : f32 to vector<16x1xf32>
    %164 = arith.mulf %162, %163 : vector<16x1xf32>
    %cst_97 = arith.constant dense<0.000000e+00> : vector<4x1xf32>
    %165 = tpu.matmul %9, %164, %cst_97 {dimension_numbers = #tpu.dot_dimension_numbers<[1], [0], [0], [1], [0, 0, 1, 1], [], []>} : vector<4x16xf32>, vector<16x1xf32>, vector<4x1xf32> -> vector<4x1xf32>
    %166 = arith.addf %165, %11 : vector<4x1xf32>
    %cst_98 = arith.constant 0.000000e+00 : f32
    %167 = vector.broadcast %cst_98 : f32 to vector<4x1xf32>
    %168 = arith.maximumf %166, %167 : vector<4x1xf32>
    %cst_99 = arith.constant dense<0.000000e+00> : vector<16x1xf32>
    %169 = tpu.matmul %13, %168, %cst_99 {dimension_numbers = #tpu.dot_dimension_numbers<[1], [0], [0], [1], [0, 0, 1, 1], [], []>} : vector<16x4xf32>, vector<4x1xf32>, vector<16x1xf32> -> vector<16x1xf32>
    %170 = arith.addf %169, %15 : vector<16x1xf32>
    %171 = vector.broadcast %170 : vector<16x1xf32> to vector<16x256xf32>
    %172 = arith.addf %160, %171 : vector<16x256xf32>
    %cst_100 = arith.constant 5.000000e-01 : f32
    %173 = vector.broadcast %cst_100 : f32 to vector<16x256xf32>
    %174 = arith.mulf %173, %172 : vector<16x256xf32>
    %175 = math.tanh %174 : vector<16x256xf32>
    %cst_101 = arith.constant 1.000000e+00 : f32
    %176 = vector.broadcast %cst_101 : f32 to vector<16x256xf32>
    %177 = arith.addf %175, %176 : vector<16x256xf32>
    %cst_102 = arith.constant 5.000000e-01 : f32
    %178 = vector.broadcast %cst_102 : f32 to vector<16x256xf32>
    %179 = arith.mulf %178, %177 : vector<16x256xf32>
    %180 = arith.mulf %118, %179 : vector<16x256xf32>
    %cst_103 = arith.constant 1.000000e+00 : f32
    %181 = vector.broadcast %cst_103 : f32 to vector<16x256xf32>
    %182 = arith.subf %181, %179 : vector<16x256xf32>
    %183 = arith.mulf %119, %182 : vector<16x256xf32>
    %184 = arith.addf %180, %183 : vector<16x256xf32>
    %c1_104 = arith.constant 1 : index
    %c0_105 = arith.constant 0 : index
    %c0_106 = arith.constant 0 : index
    %185 = vector.load %arg4[%c1_104, %c0_105, %c0_106] : memref<2x16x256xf32, #tpu.memory_space<vmem>>, vector<1x16x256xf32>
    %186 = vector.shape_cast %185 : vector<1x16x256xf32> to vector<16x256xf32>
    %187 = vector.shape_cast %184 : vector<16x256xf32> to vector<1x16x256xf32>
    tpu.vector_store %arg4[%c1_104, %c0_105, %c0_106], %187 {strides = array<i32>} : memref<2x16x256xf32, #tpu.memory_space<vmem>>, vector<1x16x256xf32>,
    return
  }
  func.func @transform_0(%arg0: i32) -> (i32, i32, i32) {
    %c0_i32 = arith.constant 0 : i32
    %c0_i32_0 = arith.constant 0 : i32
    %c0_i32_1 = arith.constant 0 : i32
    return %arg0, %c0_i32, %c0_i32_0 : i32, i32, i32
  }
  func.func @transform_1(%arg0: i32) -> (i32, i32, i32) {
    %c0_i32 = arith.constant 0 : i32
    %c0_i32_0 = arith.constant 0 : i32
    %c0_i32_1 = arith.constant 0 : i32
    return %arg0, %c0_i32, %c0_i32_0 : i32, i32, i32
  }
  func.func @transform_2(%arg0: i32) -> (i32, i32, i32) {
    %c0_i32 = arith.constant 0 : i32
    %c0_i32_0 = arith.constant 0 : i32
    %c0_i32_1 = arith.constant 0 : i32
    %c0_i32_2 = arith.constant 0 : i32
    return %c0_i32, %c0_i32_0, %c0_i32_1 : i32, i32, i32
  }
  func.func @transform_3(%arg0: i32) -> (i32, i32, i32) {
    %c0_i32 = arith.constant 0 : i32
    %c0_i32_0 = arith.constant 0 : i32
    %c0_i32_1 = arith.constant 0 : i32
    return %arg0, %c0_i32, %c0_i32_0 : i32, i32, i32
  }
}

</mosaic_0001>

<llo_original>
// kernel: iaff_forward.1
$region0: #{iaff_forward.1}
  #allocation0 [shape = 'u32[]', space=smem, size = 0x4, offset = 0x4, fixed_abs, tag = 'smem constant byte address 0x4 - core index']
  #allocation1 [shape = 'u32[144,128]{1,0:T(1,128)}', space=vmem, size = 0x12000, scoped, tag = 'internal scratch']
  %s0 = inlined_call_operand.vmem [shape: f32[4,8,256], index: 0, kind: input, shape index: {}]
  %s1 = inlined_call_operand.vmem [shape: f32[4,8,256], index: 1, kind: input, shape index: {}]
  %s2 = inlined_call_operand.vmem [shape: f32[7,32,17], index: 2, kind: input, shape index: {}]
  %s3 = inlined_call_operand.vmem [shape: f32[4,16,256], index: 3, kind: output, shape index: {}]
  %s4 = sld [smem:[#allocation0]]
  $region45: #{iaff_forward.1} parent=0
    _
  %s6 = ssub.s32 1, %s4
  %s7 = scalar_select 0, %s6, %s4
  loop: start=0, step=1, limit=4
  $region2: #{iaff_forward.1} parent=0 // loop_pre_header
    _
  $region3: #{iaff_forward.1} parent=0 // loop_header
    %s9 = sphi 0, %s13
    %p10 = scmp.ge.s32.totalorder %s9, 4
    %s19 = sphi 0, %s21
    %s22 = sphi 0, %s19
    %s23 = sphi 0, %s22
    %s39 = sphi 0, %s23
    %s45 = sphi 0, %s47
    %s48 = sphi 0, %s45
    %s49 = sphi 0, %s48
    %s65 = sphi 0, %s49
    %s69 = sphi 0, %s69
    %s71 = sphi 0, %s69
    %s72 = sphi 0, %s71
    %s86 = sphi 0, %s72
    %s92 = sphi 0, %s94
    %s95 = sphi 0, %s92
    %s96 = sphi 0, %s95
    %s112 = sphi 0, %s96
  $region4: #{iaff_forward.1} parent=0 // loop_header_branch
    %12 = sbr.rel (%p10) target = $region8
  $region5: #{iaff_forward.1} parent=0 // loop_body
    %s14 = ssub.s32 %s9, 1
    %s15 = ssub.s32 %s9, 2
    %s16 = sadd.s32 %s9, 1
    %s17 = ssub.s32 %s9, %s16
    %p18 = scmp.eq.s32.totalorder %s17, 0
    %s20 = sadd.s32 %s19, 1
    %s21 = scalar_select %p18, %s19, %s20
    %p24 = pneg %p18
    %p25 = scmp.eq.s32.totalorder %s9, 1
    %p26 = por %p24, %p25
    %p27 = scmp.ne.s32.totalorder %s19, %s22
    %p28 = scmp.eq.s32.totalorder %s9, 0
    %p29 = por %p27, %p28
    %p30 = scmp.ne.s32.totalorder %s19, %s22
    %p31 = scmp.eq.s32.totalorder %s14, 1
    %p32 = por %p30, %p31
    %p33 = scmp.ne.s32.totalorder %s22, %s23
    %p34 = scmp.eq.s32.totalorder %s14, 0
    %p35 = por %p33, %p34
    %p36 = scmp.ne.s32.totalorder %s22, %s23
    %p37 = scmp.eq.s32.totalorder %s15, 1
    %p38 = por %p36, %p37
    %p40 = scmp.ne.s32.totalorder %s23, %s39
    %p41 = scmp.eq.s32.totalorder %s15, 0
    %p42 = por %p40, %p41
    %s43 = ssub.s32 %s9, %s16
    %p44 = scmp.eq.s32.totalorder %s43, 0
    %s46 = sadd.s32 %s45, 1
    %s47 = scalar_select %p44, %s45, %s46
    %p50 = pneg %p44
    %p51 = scmp.eq.s32.totalorder %s9, 1
    %p52 = por %p50, %p51
    %p53 = scmp.ne.s32.totalorder %s45, %s48
    %p54 = scmp.eq.s32.totalorder %s9, 0
    %p55 = por %p53, %p54
    %p56 = scmp.ne.s32.totalorder %s45, %s48
    %p57 = scmp.eq.s32.totalorder %s14, 1
    %p58 = por %p56, %p57
    %p59 = scmp.ne.s32.totalorder %s48, %s49
    %p60 = scmp.eq.s32.totalorder %s14, 0
    %p61 = por %p59, %p60
    %p62 = scmp.ne.s32.totalorder %s48, %s49
    %p63 = scmp.eq.s32.totalorder %s15, 1
    %p64 = por %p62, %p63
    %p66 = scmp.ne.s32.totalorder %s49, %s65
    %p67 = scmp.eq.s32.totalorder %s15, 0
    %p68 = por %p66, %p67
    %s70 = sadd.s32 %s69, 1
    %p73 = scmp.eq.s32.totalorder %s9, 1
    %p74 = scmp.ne.s32.totalorder %s69, %s71
    %p75 = scmp.eq.s32.totalorder %s9, 0
    %p76 = por %p74, %p75
    %p77 = scmp.ne.s32.totalorder %s69, %s71
    %p78 = scmp.eq.s32.totalorder %s14, 1
    %p79 = por %p77, %p78
    %p80 = scmp.ne.s32.totalorder %s71, %s72
    %p81 = scmp.eq.s32.totalorder %s14, 0
    %p82 = por %p80, %p81
    %p83 = scmp.ne.s32.totalorder %s71, %s72
    %p84 = scmp.eq.s32.totalorder %s15, 1
    %p85 = por %p83, %p84
    %p87 = scmp.ne.s32.totalorder %s72, %s86
    %p88 = scmp.eq.s32.totalorder %s15, 0
    %p89 = por %p87, %p88
    %s90 = ssub.s32 %s9, %s16
    %p91 = scmp.eq.s32.totalorder %s90, 0
    %s93 = sadd.s32 %s92, 1
    %s94 = scalar_select %p91, %s92, %s93
    %p97 = pneg %p91
    %p98 = scmp.eq.s32.totalorder %s9, 1
    %p99 = por %p97, %p98
    %p100 = scmp.ne.s32.totalorder %s92, %s95
    %p101 = scmp.eq.s32.totalorder %s9, 0
    %p102 = por %p100, %p101
    %p103 = scmp.ne.s32.totalorder %s92, %s95
    %p104 = scmp.eq.s32.totalorder %s14, 1
    %p105 = por %p103, %p104
    %p106 = scmp.ne.s32.totalorder %s95, %s96
    %p107 = scmp.eq.s32.totalorder %s14, 0
    %p108 = por %p106, %p107
    %p109 = scmp.ne.s32.totalorder %s95, %s96
    %p110 = scmp.eq.s32.totalorder %s15, 1
    %p111 = por %p109, %p110
    %p113 = scmp.ne.s32.totalorder %s96, %s112
    %p114 = scmp.eq.s32.totalorder %s15, 0
    %p115 = por %p113, %p114
    %p116 = scmp.le.s32.totalorder 1, %s9
    %p117 = scmp.lt.s32.totalorder %s9, 3
    %p118 = pnand %p116, %p117
    %p119 = pneg %p118
    // Predicated region
    $region9: #{iaff_forward.1} parent=5 // pred_check
      _
    $region10: #{iaff_forward.1} parent=5 // pred_check_branch
      %121 = sbr.rel (%p118) target = $region12
    $region11: #{iaff_forward.1} parent=5 // pred_region
      %s122 = ssub.s32 %s9, 1
      // Predicated region
      $region13: #{iaff_forward.1} parent=11 // pred_check
        %p123 = pneg %p82
      $region14: #{iaff_forward.1} parent=11 // pred_check_branch
        %125 = sbr.rel (%p123) target = $region16
      $region15: #{iaff_forward.1} parent=11 // pred_region
        _
      $region16: #{iaff_forward.1} parent=11 // pred_fallthru
        _
    $region12: #{iaff_forward.1} parent=5 // pred_fallthru
      _
    %p126 = scmp.lt.s32.totalorder %s9, 2
    // Predicated region
    $region17: #{iaff_forward.1} parent=5 // pred_check
      %p127 = pneg %p126
    $region18: #{iaff_forward.1} parent=5 // pred_check_branch
      %129 = sbr.rel (%p127) target = $region20
    $region19: #{iaff_forward.1} parent=5 // pred_region
      // Predicated region
      $region21: #{iaff_forward.1} parent=19 // pred_check
        %p130 = pneg %p29
      $region22: #{iaff_forward.1} parent=19 // pred_check_branch
        %132 = sbr.rel (%p130) target = $region24
      $region23: #{iaff_forward.1} parent=19 // pred_region
        %s133 = smul.u32 2, %s9
        %p134 = scmp.lt.s32.totalorder %s133, 3
        %s135 = scalar_select %p134, %s133, 3
        %s136 = smul.addr %s135, 2
        %s137 = smul.addr %s136, 8
        %s138 = scalar_lea.vmem %s0, %s137
        %s139 = smul.u32 2, %s9
      $region24: #{iaff_forward.1} parent=19 // pred_fallthru
        _
      // Predicated region
      $region25: #{iaff_forward.1} parent=19 // pred_check
        %p140 = pneg %p55
      $region26: #{iaff_forward.1} parent=19 // pred_check_branch
        %142 = sbr.rel (%p140) target = $region28
      $region27: #{iaff_forward.1} parent=19 // pred_region
        %s143 = smul.u32 2, %s9
        %p144 = scmp.lt.s32.totalorder %s143, 3
        %s145 = scalar_select %p144, %s143, 3
        %s146 = smul.addr %s145, 2
        %s147 = smul.addr %s146, 8
        %s148 = scalar_lea.vmem %s1, %s147
        %s149 = smul.u32 2, %s9
      $region28: #{iaff_forward.1} parent=19 // pred_fallthru
        _
    $region20: #{iaff_forward.1} parent=5 // pred_fallthru
      _
    %p150 = scmp.le.s32.totalorder 1, %s9
    %p151 = scmp.lt.s32.totalorder %s9, 3
    %p152 = pnand %p150, %p151
    %p153 = pneg %p152
    // Predicated region
    $region29: #{iaff_forward.1} parent=5 // pred_check
      _
    $region30: #{iaff_forward.1} parent=5 // pred_check_branch
      %155 = sbr.rel (%p152) target = $region32
    $region31: #{iaff_forward.1} parent=5 // pred_region
      %s156 = ssub.s32 %s9, 1
      %s157 = smul.u32 2, %s14
      %p158 = scmp.lt.s32.totalorder %s157, 3
      %s159 = scalar_select %p158, %s157, 3
      %s160 = smul.addr %s159, 2
      %s161 = smul.addr %s160, 8
      %s162 = scalar_lea.vmem %s0, %s161
      %p163 = pneg %p35
      %p164 = pneg %p32
      %s165 = smul.u32 2, %s14
      %p166 = scmp.lt.s32.totalorder %s165, 3
      %s167 = scalar_select %p166, %s165, 3
      %s168 = smul.addr %s167, 2
      %s169 = smul.addr %s168, 8
      %s170 = scalar_lea.vmem %s1, %s169
      %p171 = pneg %p61
      %p172 = pneg %p58
      %p173 = pneg %p82
      %p174 = pneg %p79
      %p175 = pneg %p108
      %p176 = pneg %p105
      %s177 = smul.u32 2, %s14
      %p178 = scmp.lt.s32.totalorder %s177, 3
      %s179 = scalar_select %p178, %s177, 3
      %s180 = smul.addr %s179, 4
      %s181 = smul.addr %s180, 8
      %s182 = scalar_lea.vmem %s3, %s181
      %s183 = smul.u32 2, %s14
      %p184 = scmp.lt.s32.totalorder %s183, 3
      %s185 = scalar_select %p184, %s183, 3
      %s186 = smul.addr %s185, 2
      %s187 = smul.addr %s186, 8
      %s188 = scalar_lea.vmem %s0, %s187
      %s189 = smul.u32 2, %s14
      %s190 = smul.u32 2, %s14
      %p191 = scmp.lt.s32.totalorder %s190, 3
      %s192 = scalar_select %p191, %s190, 3
      %s193 = smul.addr %s192, 2
      %s194 = smul.addr %s193, 8
      %s195 = scalar_lea.vmem %s1, %s194
      %s196 = smul.u32 2, %s14
      %s197 = smul.u32 2, %s14
      %p198 = scmp.lt.s32.totalorder %s197, 3
      %s199 = scalar_select %p198, %s197, 3
      %s200 = smul.addr %s199, 4
      %s201 = smul.addr %s200, 8
      %s202 = scalar_lea.vmem %s3, %s201
      %s203 = smul.u32 2, %s14
      %s204 = scalar_lea.vmem %s2, 32
      %v205 = vld [vmem:[%s204] sm:$0xf]
      %s206 = scalar_lea.vmem %s2, 64
      %v207 = vld [vmem:[%s206] sm:$0xff]
      %v208 = vld [vmem:[%s206 + $0x8] sm:$0xff]
      %s209 = scalar_lea.vmem %s2, 96
      %v210 = vld [vmem:[%s209] sm:$0xf]
      %s211 = scalar_lea.vmem %s2, 128
      %v212 = vld [vmem:[%s211] sm:$0xff]
      %v213 = vld [vmem:[%s211 + $0x8] sm:$0xff]
      %s214 = scalar_lea.vmem %s2, 160
      %v215 = vld [vmem:[%s214] sm:$0xf]
      %s216 = scalar_lea.vmem %s2, 192
      %v217 = vld [vmem:[%s216] sm:$0xff]
      %v218 = vld [vmem:[%s216 + $0x8] sm:$0xff]
      %v219 = vld [vmem:[%s188] sm:$0xff]
      %v220 = vld [vmem:[%s188 + $0x8] sm:$0xff]
      %v221 = vld [vmem:[%s195] sm:$0xff]
      %v222 = vld [vmem:[%s195 + $0x8] sm:$0xff]
      %v223 = vld [vmem:[%s2] sm:$0xff]
      %v224 = vld [vmem:[%s2 + $0x8] sm:$0xff]
      %v225 = vld [vmem:[%s2 + $0x10] sm:$0xff]
      %v226 = vld [vmem:[%s2 + $0x18] sm:$0xff]
      %228 = vset.pattern.permute.xlu0 16
      %229 = vperm.xlu0 %228, %v223
      %v230 = vpop.permute.xlu0 %229
      %233 = vset.pattern.permute.xlu0 16
      %234 = vperm.xlu0 %233, %v224
      %v235 = vpop.permute.xlu0 %234
      %238 = vset.pattern.permute.xlu0 16
      %239 = vperm.xlu0 %238, %v225
      %v240 = vpop.permute.xlu0 %239
      %243 = vset.pattern.permute.xlu0 16
      %244 = vperm.xlu0 %243, %v226
      %v245 = vpop.permute.xlu0 %244
      %vm247 = vcmask 130048
      %v248 = vsel %vm247, %v223, 0
      %v250 = vsel %vm247, %v224, 0
      %v252 = vsel %vm247, %v225, 0
      %v254 = vsel %vm247, %v226, 0
      %256 = vmatprep.subr.mxu0 %v220
      %257 = vmatpush1.msra.mxu0 %v219
      %258 = vmatprep.subr.mxu0 %v222
      %259 = vmatpush1.msra.mxu0 %v221
      %260 = vmatprep.subr.mxu0 0.0
      %261 = vmatpush1.msra.mxu0 0.0
      %262 = vmatprep.subr.mxu0 0.0
      %263 = vmatpush1.msra.mxu0 0.0
      %264 = vmatprep.subr.mxu0 0.0
      %265 = vmatpush1.msra.mxu0 0.0
      %266 = vmatprep.subr.mxu0 0.0
      %267 = vmatpush1.msra.mxu0 0.0
      %268 = vmatprep.subr.mxu0 0.0
      %269 = vmatpush1.msra.mxu0 0.0
      %270 = vmatprep.subr.mxu0 0.0
      %271 = vmatpush1.msra.mxu0 0.0
      %272 = vmatprep.subr.mxu0 0.0
      %273 = vmatpush1.msra.mxu0 0.0
      %274 = vmatprep.subr.mxu0 0.0
      %275 = vmatpush1.msra.mxu0 0.0
      %276 = vmatprep.subr.mxu0 0.0
      %277 = vmatpush1.msra.mxu0 0.0
      %278 = vmatprep.subr.mxu0 0.0
      %279 = vmatpush1.msra.mxu0 0.0
      %280 = vmatprep.subr.mxu0 0.0
      %281 = vmatpush1.msra.mxu0 0.0
      %282 = vmatprep.subr.mxu0 0.0
      %283 = vmatpush1.msra.mxu0 0.0
      %284 = vmatprep.subr.mxu0 0.0
      %285 = vmatpush1.msra.mxu0 0.0
      %286 = vmatprep.subr.mxu0 0.0
      %287 = vmatpush1.msra.mxu0 0.0
      %288 = vmatprep.subr.mxu0 0.0
      %289 = vmatpush1.msra.mxu0 0.0
      %290 = vmatprep.subr.mxu0 0.0
      %291 = vmatpush1.msra.mxu0 0.0
      %292 = vmatprep.subr.mxu0 0.0
      %293 = vmatpush1.msra.mxu0 0.0
      %294 = vmatprep.subr.mxu0 0.0
      %295 = vmatpush1.msra.mxu0 0.0
      %296 = vmatprep.subr.mxu0 0.0
      %297 = vmatpush1.msra.mxu0 0.0
      %298 = vmatprep.subr.mxu0 0.0
      %299 = vmatpush1.msra.mxu0 0.0
      %300 = vmatprep.subr.mxu0 0.0
      %301 = vmatpush1.msra.mxu0 0.0
      %302 = vmatprep.subr.mxu0 0.0
      %303 = vmatpush1.msra.mxu0 0.0
      %304 = vmatprep.subr.mxu0 0.0
      %305 = vmatpush1.msra.mxu0 0.0
      %306 = vmatprep.subr.mxu0 0.0
      %307 = vmatpush1.msra.mxu0 0.0
      %308 = vmatprep.subr.mxu0 0.0
      %309 = vmatpush1.msra.mxu0 0.0
      %310 = vmatprep.subr.mxu0 0.0
      %311 = vmatpush1.msra.mxu0 0.0
      %312 = vmatprep.subr.mxu0 0.0
      %313 = vmatpush1.msra.mxu0 0.0
      %314 = vmatprep.subr.mxu0 0.0
      %315 = vmatpush1.msra.mxu0 0.0
      %316 = vmatprep.subr.mxu0 0.0
      %317 = vmatpush1.msra.mxu0 0.0
      %318 = vmatprep.subr.mxu0 0.0
      %319 = vmatpush1.msra.mxu0 0.0
      %320 = vmatprep.mubr.f32.mxu0 0.0
      %321 = vmatmul.mubr.f32.gmra.mrb[0].mxu0 %v248
      %v322 = vpop.f32.mrb[0].mxu0
      %v323 = vadd.f32 %v230, %v322
      %v324 = vpop.f32.mrb[0].mxu0
      %v325 = vadd.f32 %v230, %v324
      %326 = vmatprep.mubr.f32.mxu0 0.0
      %327 = vmatmul.mubr.f32.gmra.mrb[0].mxu0 %v250
      %v328 = vpop.f32.mrb[0].mxu0
      %v329 = vadd.f32 %v235, %v328
      %v330 = vpop.f32.mrb[0].mxu0
      %v331 = vadd.f32 %v235, %v330
      %332 = vmatprep.mubr.f32.mxu0 0.0
      %333 = vmatmul.mubr.f32.gmra.mrb[0].mxu0 %v252
      %v334 = vpop.f32.mrb[0].mxu0
      %v335 = vadd.f32 %v240, %v334
      %v336 = vpop.f32.mrb[0].mxu0
      %v337 = vadd.f32 %v240, %v336
      %338 = vmatprep.mubr.f32.mxu0 0.0
      %339 = vmatmul.mubr.f32.gmra.mrb[0].mxu0 %v254
      %v340 = vpop.f32.mrb[0].mxu0
      %v341 = vadd.f32 %v245, %v340
      %v342 = vpop.f32.mrb[0].mxu0
      %v343 = vadd.f32 %v245, %v342
      %344 = vdwg.mxu0
      %v345 = vadd.f32 %v323, %v335
      %v346 = vadd.f32 %v325, %v337
      %v347 = vadd.f32 %v329, %v341
      %v348 = vadd.f32 %v331, %v343
      %350 = vset.pattern.permute.xlu0 16
      %351 = vperm.xlu0 %350, %v205
      %v352 = vpop.permute.xlu0 %351
      %v354 = vsel %vm247, %v205, 0
      %356 = vmatprep.subr.mxu0 %v346
      %357 = vmatpush1.msra.mxu0 %v345
      %358 = vmatprep.subr.mxu0 %v348
      %359 = vmatpush1.msra.mxu0 %v347
      %360 = vmatprep.subr.mxu0 0.0
      %361 = vmatpush1.msra.mxu0 0.0
      %362 = vmatprep.subr.mxu0 0.0
      %363 = vmatpush1.msra.mxu0 0.0
      %364 = vmatprep.subr.mxu0 0.0
      %365 = vmatpush1.msra.mxu0 0.0
      %366 = vmatprep.subr.mxu0 0.0
      %367 = vmatpush1.msra.mxu0 0.0
      %368 = vmatprep.subr.mxu0 0.0
      %369 = vmatpush1.msra.mxu0 0.0
      %370 = vmatprep.subr.mxu0 0.0
      %371 = vmatpush1.msra.mxu0 0.0
      %372 = vmatprep.subr.mxu0 0.0
      %373 = vmatpush1.msra.mxu0 0.0
      %374 = vmatprep.subr.mxu0 0.0
      %375 = vmatpush1.msra.mxu0 0.0
      %376 = vmatprep.subr.mxu0 0.0
      %377 = vmatpush1.msra.mxu0 0.0
      %378 = vmatprep.subr.mxu0 0.0
      %379 = vmatpush1.msra.mxu0 0.0
      %380 = vmatprep.subr.mxu0 0.0
      %381 = vmatpush1.msra.mxu0 0.0
      %382 = vmatprep.subr.mxu0 0.0
      %383 = vmatpush1.msra.mxu0 0.0
      %384 = vmatprep.subr.mxu0 0.0
      %385 = vmatpush1.msra.mxu0 0.0
      %386 = vmatprep.subr.mxu0 0.0
      %387 = vmatpush1.msra.mxu0 0.0
      %388 = vmatprep.subr.mxu0 0.0
      %389 = vmatpush1.msra.mxu0 0.0
      %390 = vmatprep.subr.mxu0 0.0
      %391 = vmatpush1.msra.mxu0 0.0
      %392 = vmatprep.subr.mxu0 0.0
      %393 = vmatpush1.msra.mxu0 0.0
      %394 = vmatprep.subr.mxu0 0.0
      %395 = vmatpush1.msra.mxu0 0.0
      %396 = vmatprep.subr.mxu0 0.0
      %397 = vmatpush1.msra.mxu0 0.0
      %398 = vmatprep.subr.mxu0 0.0
      %399 = vmatpush1.msra.mxu0 0.0
      %400 = vmatprep.subr.mxu0 0.0
      %401 = vmatpush1.msra.mxu0 0.0
      %402 = vmatprep.subr.mxu0 0.0
      %403 = vmatpush1.msra.mxu0 0.0
      %404 = vmatprep.subr.mxu0 0.0
      %405 = vmatpush1.msra.mxu0 0.0
      %406 = vmatprep.subr.mxu0 0.0
      %407 = vmatpush1.msra.mxu0 0.0
      %408 = vmatprep.subr.mxu0 0.0
      %409 = vmatpush1.msra.mxu0 0.0
      %410 = vmatprep.subr.mxu0 0.0
      %411 = vmatpush1.msra.mxu0 0.0
      %412 = vmatprep.subr.mxu0 0.0
      %413 = vmatpush1.msra.mxu0 0.0
      %414 = vmatprep.subr.mxu0 0.0
      %415 = vmatpush1.msra.mxu0 0.0
      %416 = vmatprep.subr.mxu0 0.0
      %417 = vmatpush1.msra.mxu0 0.0
      %418 = vmatprep.subr.mxu0 0.0
      %419 = vmatpush1.msra.mxu0 0.0
      %420 = vmatprep.mubr.f32.mxu0 0.0
      %421 = vmatmul.mubr.f32.gmra.mrb[0].mxu0 %v354
      %v422 = vpop.f32.mrb[0].mxu0
      %v423 = vadd.f32 %v352, %v422
      %v424 = vpop.f32.mrb[0].mxu0
      %v425 = vadd.f32 %v352, %v424
      %426 = vdwg.mxu0
      %v427 = vmax.f32 %v423, 0.0
      %v428 = vmax.f32 %v425, 0.0
      %430 = vset.pattern.permute.xlu0 16
      %431 = vperm.xlu0 %430, %v207
      %v432 = vpop.permute.xlu0 %431
      %435 = vset.pattern.permute.xlu0 16
      %436 = vperm.xlu0 %435, %v208
      %v437 = vpop.permute.xlu0 %436
      %vm439 = vcmask 31744
      %v440 = vsel %vm439, %v207, 0
      %v442 = vsel %vm439, %v208, 0
      %vm444 = vcmask 1043456
      %v446 = vsel %vm444, %v427, 0
      %v449 = vsel %vm444, %v428, 0
      %451 = vmatprep.subr.mxu0 %v449
      %452 = vmatpush1.msra.mxu0 %v446
      %453 = vmatprep.subr.mxu0 0.0
      %454 = vmatpush1.msra.mxu0 0.0
      %455 = vmatprep.subr.mxu0 0.0
      %456 = vmatpush1.msra.mxu0 0.0
      %457 = vmatprep.subr.mxu0 0.0
      %458 = vmatpush1.msra.mxu0 0.0
      %459 = vmatprep.subr.mxu0 0.0
      %460 = vmatpush1.msra.mxu0 0.0
      %461 = vmatprep.subr.mxu0 0.0
      %462 = vmatpush1.msra.mxu0 0.0
      %463 = vmatprep.subr.mxu0 0.0
      %464 = vmatpush1.msra.mxu0 0.0
      %465 = vmatprep.subr.mxu0 0.0
      %466 = vmatpush1.msra.mxu0 0.0
      %467 = vmatprep.subr.mxu0 0.0
      %468 = vmatpush1.msra.mxu0 0.0
      %469 = vmatprep.subr.mxu0 0.0
      %470 = vmatpush1.msra.mxu0 0.0
      %471 = vmatprep.subr.mxu0 0.0
      %472 = vmatpush1.msra.mxu0 0.0
      %473 = vmatprep.subr.mxu0 0.0
      %474 = vmatpush1.msra.mxu0 0.0
      %475 = vmatprep.subr.mxu0 0.0
      %476 = vmatpush1.msra.mxu0 0.0
      %477 = vmatprep.subr.mxu0 0.0
      %478 = vmatpush1.msra.mxu0 0.0
      %479 = vmatprep.subr.mxu0 0.0
      %480 = vmatpush1.msra.mxu0 0.0
      %481 = vmatprep.subr.mxu0 0.0
      %482 = vmatpush1.msra.mxu0 0.0
      %483 = vmatprep.subr.mxu0 0.0
      %484 = vmatpush1.msra.mxu0 0.0
      %485 = vmatprep.subr.mxu0 0.0
      %486 = vmatpush1.msra.mxu0 0.0
      %487 = vmatprep.subr.mxu0 0.0
      %488 = vmatpush1.msra.mxu0 0.0
      %489 = vmatprep.subr.mxu0 0.0
      %490 = vmatpush1.msra.mxu0 0.0
      %491 = vmatprep.subr.mxu0 0.0
      %492 = vmatpush1.msra.mxu0 0.0
      %493 = vmatprep.subr.mxu0 0.0
      %494 = vmatpush1.msra.mxu0 0.0
      %495 = vmatprep.subr.mxu0 0.0
      %496 = vmatpush1.msra.mxu0 0.0
      %497 = vmatprep.subr.mxu0 0.0
      %498 = vmatpush1.msra.mxu0 0.0
      %499 = vmatprep.subr.mxu0 0.0
      %500 = vmatpush1.msra.mxu0 0.0
      %501 = vmatprep.subr.mxu0 0.0
      %502 = vmatpush1.msra.mxu0 0.0
      %503 = vmatprep.subr.mxu0 0.0
      %504 = vmatpush1.msra.mxu0 0.0
      %505 = vmatprep.subr.mxu0 0.0
      %506 = vmatpush1.msra.mxu0 0.0
      %507 = vmatprep.subr.mxu0 0.0
      %508 = vmatpush1.msra.mxu0 0.0
      %509 = vmatprep.subr.mxu0 0.0
      %510 = vmatpush1.msra.mxu0 0.0
      %511 = vmatprep.subr.mxu0 0.0
      %512 = vmatpush1.msra.mxu0 0.0
      %513 = vmatprep.subr.mxu0 0.0
      %514 = vmatpush1.msra.mxu0 0.0
      %515 = vmatprep.mubr.f32.mxu0 0.0
      %516 = vmatmul.mubr.f32.gmra.mrb[0].mxu0 %v440
      %v517 = vpop.f32.mrb[0].mxu0
      %v518 = vadd.f32 %v432, %v517
      %v519 = vpop.f32.mrb[0].mxu0
      %v520 = vadd.f32 %v432, %v519
      %521 = vmatprep.mubr.f32.mxu0 0.0
      %522 = vmatmul.mubr.f32.gmra.mrb[0].mxu0 %v442
      %v523 = vpop.f32.mrb[0].mxu0
      %v524 = vadd.f32 %v437, %v523
      %v525 = vpop.f32.mrb[0].mxu0
      %v526 = vadd.f32 %v437, %v525
      %527 = vdwg.mxu0
      %v528 = vadd.f32 %v345, %v346
      %529 = vadd.xlane.f32.xlu0 %v528
      %v530 = vpop.xlane.xlu0 %529
      %v531 = vadd.f32 %v347, %v348
      %532 = vadd.xlane.f32.xlu0 %v531
      %v533 = vpop.xlane.xlu0 %532
      %v534 = vmul.f32 %v530, 0.00390625
      %v535 = vmul.f32 %v533, 0.00390625
      %537 = vrot.lane.b32.xlu0 %v210, 112
      %v538 = vpop.permute.xlu0 %537
      %v540 = vsel %vm247, %v210, 0
      %542 = vmatprep.subr.mxu0 0.0
      %543 = vmatpush1.msra.mxu0 %v534
      %544 = vmatprep.subr.mxu0 0.0
      %545 = vmatpush1.msra.mxu0 %v535
      %546 = vmatprep.subr.mxu0 0.0
      %547 = vmatpush1.msra.mxu0 0.0
      %548 = vmatprep.subr.mxu0 0.0
      %549 = vmatpush1.msra.mxu0 0.0
      %550 = vmatprep.subr.mxu0 0.0
      %551 = vmatpush1.msra.mxu0 0.0
      %552 = vmatprep.subr.mxu0 0.0
      %553 = vmatpush1.msra.mxu0 0.0
      %554 = vmatprep.subr.mxu0 0.0
      %555 = vmatpush1.msra.mxu0 0.0
      %556 = vmatprep.subr.mxu0 0.0
      %557 = vmatpush1.msra.mxu0 0.0
      %558 = vmatprep.subr.mxu0 0.0
      %559 = vmatpush1.msra.mxu0 0.0
      %560 = vmatprep.subr.mxu0 0.0
      %561 = vmatpush1.msra.mxu0 0.0
      %562 = vmatprep.subr.mxu0 0.0
      %563 = vmatpush1.msra.mxu0 0.0
      %564 = vmatprep.subr.mxu0 0.0
      %565 = vmatpush1.msra.mxu0 0.0
      %566 = vmatprep.subr.mxu0 0.0
      %567 = vmatpush1.msra.mxu0 0.0
      %568 = vmatprep.subr.mxu0 0.0
      %569 = vmatpush1.msra.mxu0 0.0
      %570 = vmatprep.subr.mxu0 0.0
      %571 = vmatpush1.msra.mxu0 0.0
      %572 = vmatprep.subr.mxu0 0.0
      %573 = vmatpush1.msra.mxu0 0.0
      %574 = vmatprep.subr.mxu0 0.0
      %575 = vmatpush1.msra.mxu0 0.0
      %576 = vmatprep.subr.mxu0 0.0
      %577 = vmatpush1.msra.mxu0 0.0
      %578 = vmatprep.subr.mxu0 0.0
      %579 = vmatpush1.msra.mxu0 0.0
      %580 = vmatprep.subr.mxu0 0.0
      %581 = vmatpush1.msra.mxu0 0.0
      %582 = vmatprep.subr.mxu0 0.0
      %583 = vmatpush1.msra.mxu0 0.0
      %584 = vmatprep.subr.mxu0 0.0
      %585 = vmatpush1.msra.mxu0 0.0
      %586 = vmatprep.subr.mxu0 0.0
      %587 = vmatpush1.msra.mxu0 0.0
      %588 = vmatprep.subr.mxu0 0.0
      %589 = vmatpush1.msra.mxu0 0.0
      %590 = vmatprep.subr.mxu0 0.0
      %591 = vmatpush1.msra.mxu0 0.0
      %592 = vmatprep.subr.mxu0 0.0
      %593 = vmatpush1.msra.mxu0 0.0
      %594 = vmatprep.subr.mxu0 0.0
      %595 = vmatpush1.msra.mxu0 0.0
      %596 = vmatprep.subr.mxu0 0.0
      %597 = vmatpush1.msra.mxu0 0.0
      %598 = vmatprep.subr.mxu0 0.0
      %599 = vmatpush1.msra.mxu0 0.0
      %600 = vmatprep.subr.mxu0 0.0
      %601 = vmatpush1.msra.mxu0 0.0
      %602 = vmatprep.subr.mxu0 0.0
      %603 = vmatpush1.msra.mxu0 0.0
      %604 = vmatprep.subr.mxu0 0.0
      %605 = vmatpush1.msra.mxu0 0.0
      %606 = vmatprep.mubr.f32.mxu0 0.0
      %607 = vmatmul.mubr.f32.gmra.mrb[0].mxu0 %v540
      %v608 = vpop.f32.mrb[0].mxu0
      %v609 = vadd.f32 %v538, %v608
      %v610 = vpop.f32.mrb[0].mxu0
      %611 = vdwg.mxu0
      %v612 = vmax.f32 %v609, 0.0
      %615 = vrot.lane.b32.xlu0 %v212, 112
      %v616 = vpop.permute.xlu0 %615
      %617 = vrot.lane.b32.xlu0 %v213, 112
      %v618 = vpop.permute.xlu0 %617
      %v621 = vsel %vm439, %v212, 0
      %v623 = vsel %vm439, %v213, 0
      %v626 = vsel %vm444, %v612, 0
      %628 = vmatprep.subr.mxu0 0.0
      %629 = vmatpush1.msra.mxu0 %v626
      %630 = vmatprep.subr.mxu0 0.0
      %631 = vmatpush1.msra.mxu0 0.0
      %632 = vmatprep.subr.mxu0 0.0
      %633 = vmatpush1.msra.mxu0 0.0
      %634 = vmatprep.subr.mxu0 0.0
      %635 = vmatpush1.msra.mxu0 0.0
      %636 = vmatprep.subr.mxu0 0.0
      %637 = vmatpush1.msra.mxu0 0.0
      %638 = vmatprep.subr.mxu0 0.0
      %639 = vmatpush1.msra.mxu0 0.0
      %640 = vmatprep.subr.mxu0 0.0
      %641 = vmatpush1.msra.mxu0 0.0
      %642 = vmatprep.subr.mxu0 0.0
      %643 = vmatpush1.msra.mxu0 0.0
      %644 = vmatprep.subr.mxu0 0.0
      %645 = vmatpush1.msra.mxu0 0.0
      %646 = vmatprep.subr.mxu0 0.0
      %647 = vmatpush1.msra.mxu0 0.0
      %648 = vmatprep.subr.mxu0 0.0
      %649 = vmatpush1.msra.mxu0 0.0
      %650 = vmatprep.subr.mxu0 0.0
      %651 = vmatpush1.msra.mxu0 0.0
      %652 = vmatprep.subr.mxu0 0.0
      %653 = vmatpush1.msra.mxu0 0.0
      %654 = vmatprep.subr.mxu0 0.0
      %655 = vmatpush1.msra.mxu0 0.0
      %656 = vmatprep.subr.mxu0 0.0
      %657 = vmatpush1.msra.mxu0 0.0
      %658 = vmatprep.subr.mxu0 0.0
      %659 = vmatpush1.msra.mxu0 0.0
      %660 = vmatprep.subr.mxu0 0.0
      %661 = vmatpush1.msra.mxu0 0.0
      %662 = vmatprep.subr.mxu0 0.0
      %663 = vmatpush1.msra.mxu0 0.0
      %664 = vmatprep.subr.mxu0 0.0
      %665 = vmatpush1.msra.mxu0 0.0
      %666 = vmatprep.subr.mxu0 0.0
      %667 = vmatpush1.msra.mxu0 0.0
      %668 = vmatprep.subr.mxu0 0.0
      %669 = vmatpush1.msra.mxu0 0.0
      %670 = vmatprep.subr.mxu0 0.0
      %671 = vmatpush1.msra.mxu0 0.0
      %672 = vmatprep.subr.mxu0 0.0
      %673 = vmatpush1.msra.mxu0 0.0
      %674 = vmatprep.subr.mxu0 0.0
      %675 = vmatpush1.msra.mxu0 0.0
      %676 = vmatprep.subr.mxu0 0.0
      %677 = vmatpush1.msra.mxu0 0.0
      %678 = vmatprep.subr.mxu0 0.0
      %679 = vmatpush1.msra.mxu0 0.0
      %680 = vmatprep.subr.mxu0 0.0
      %681 = vmatpush1.msra.mxu0 0.0
      %682 = vmatprep.subr.mxu0 0.0
      %683 = vmatpush1.msra.mxu0 0.0
      %684 = vmatprep.subr.mxu0 0.0
      %685 = vmatpush1.msra.mxu0 0.0
      %686 = vmatprep.subr.mxu0 0.0
      %687 = vmatpush1.msra.mxu0 0.0
      %688 = vmatprep.subr.mxu0 0.0
      %689 = vmatpush1.msra.mxu0 0.0
      %690 = vmatprep.subr.mxu0 0.0
      %691 = vmatpush1.msra.mxu0 0.0
      %692 = vmatprep.mubr.f32.mxu0 0.0
      %693 = vmatmul.mubr.f32.gmra.mrb[0].mxu0 %v621
      %v694 = vpop.f32.mrb[0].mxu0
      %v695 = vadd.f32 %v616, %v694
      %v696 = vpop.f32.mrb[0].mxu0
      %697 = vmatprep.mubr.f32.mxu0 0.0
      %698 = vmatmul.mubr.f32.gmra.mrb[0].mxu0 %v623
      %v699 = vpop.f32.mrb[0].mxu0
      %v700 = vadd.f32 %v618, %v699
      %v701 = vpop.f32.mrb[0].mxu0
      %702 = vdwg.mxu0
      %704 = vset.pattern.permute.xlu0 0
      %705 = vperm.xlu0 %704, %v695
      %v706 = vpop.permute.xlu0 %705
      %709 = vset.pattern.permute.xlu0 0
      %710 = vperm.xlu0 %709, %v700
      %v711 = vpop.permute.xlu0 %710
      %v713 = vadd.f32 %v518, %v706
      %v714 = vadd.f32 %v520, %v706
      %v715 = vadd.f32 %v524, %v711
      %v716 = vadd.f32 %v526, %v711
      %v717 = vmul.f32 %v713, 0.5
      %v718 = vmul.f32 %v714, 0.5
      %v719 = vmul.f32 %v715, 0.5
      %v720 = vmul.f32 %v716, 0.5
      %v721 = vtanh.pop %v717
      %v722 = vtanh.pop %v718
      %v723 = vtanh.pop %v719
      %v724 = vtanh.pop %v720
      %v725 = vadd.f32 %v721, 1.0
      %v726 = vadd.f32 %v722, 1.0
      %v727 = vadd.f32 %v723, 1.0
      %v728 = vadd.f32 %v724, 1.0
      %v729 = vmul.f32 %v725, 0.5
      %v730 = vmul.f32 %v726, 0.5
      %v731 = vmul.f32 %v727, 0.5
      %v732 = vmul.f32 %v728, 0.5
      %v733 = vmul.f32 %v323, %v729
      %v734 = vmul.f32 %v325, %v730
      %v735 = vmul.f32 %v329, %v731
      %v736 = vmul.f32 %v331, %v732
      %v737 = vsub.f32 1.0, %v729
      %v738 = vsub.f32 1.0, %v730
      %v739 = vsub.f32 1.0, %v731
      %v740 = vsub.f32 1.0, %v732
      %v741 = vmul.f32 %v335, %v737
      %v742 = vmul.f32 %v337, %v738
      %v743 = vmul.f32 %v341, %v739
      %v744 = vmul.f32 %v343, %v740
      %v745 = vadd.f32 %v733, %v741
      %v746 = vadd.f32 %v734, %v742
      %v747 = vadd.f32 %v735, %v743
      %v748 = vadd.f32 %v736, %v744
      %750 = vset.pattern.permute.xlu0 16
      %751 = vperm.xlu0 %750, %v215
      %v752 = vpop.permute.xlu0 %751
      %v754 = vsel %vm247, %v215, 0
      %756 = vmatprep.subr.mxu0 %v746
      %757 = vmatpush1.msra.mxu0 %v745
      %758 = vmatprep.subr.mxu0 %v748
      %759 = vmatpush1.msra.mxu0 %v747
      %760 = vmatprep.subr.mxu0 0.0
      %761 = vmatpush1.msra.mxu0 0.0
      %762 = vmatprep.subr.mxu0 0.0
      %763 = vmatpush1.msra.mxu0 0.0
      %764 = vmatprep.subr.mxu0 0.0
      %765 = vmatpush1.msra.mxu0 0.0
      %766 = vmatprep.subr.mxu0 0.0
      %767 = vmatpush1.msra.mxu0 0.0
      %768 = vmatprep.subr.mxu0 0.0
      %769 = vmatpush1.msra.mxu0 0.0
      %770 = vmatprep.subr.mxu0 0.0
      %771 = vmatpush1.msra.mxu0 0.0
      %772 = vmatprep.subr.mxu0 0.0
      %773 = vmatpush1.msra.mxu0 0.0
      %774 = vmatprep.subr.mxu0 0.0
      %775 = vmatpush1.msra.mxu0 0.0
      %776 = vmatprep.subr.mxu0 0.0
      %777 = vmatpush1.msra.mxu0 0.0
      %778 = vmatprep.subr.mxu0 0.0
      %779 = vmatpush1.msra.mxu0 0.0
      %780 = vmatprep.subr.mxu0 0.0
      %781 = vmatpush1.msra.mxu0 0.0
      %782 = vmatprep.subr.mxu0 0.0
      %783 = vmatpush1.msra.mxu0 0.0
      %784 = vmatprep.subr.mxu0 0.0
      %785 = vmatpush1.msra.mxu0 0.0
      %786 = vmatprep.subr.mxu0 0.0
      %787 = vmatpush1.msra.mxu0 0.0
      %788 = vmatprep.subr.mxu0 0.0
      %789 = vmatpush1.msra.mxu0 0.0
      %790 = vmatprep.subr.mxu0 0.0
      %791 = vmatpush1.msra.mxu0 0.0
      %792 = vmatprep.subr.mxu0 0.0
      %793 = vmatpush1.msra.mxu0 0.0
      %794 = vmatprep.subr.mxu0 0.0
      %795 = vmatpush1.msra.mxu0 0.0
      %796 = vmatprep.subr.mxu0 0.0
      %797 = vmatpush1.msra.mxu0 0.0
      %798 = vmatprep.subr.mxu0 0.0
      %799 = vmatpush1.msra.mxu0 0.0
      %800 = vmatprep.subr.mxu0 0.0
      %801 = vmatpush1.msra.mxu0 0.0
      %802 = vmatprep.subr.mxu0 0.0
      %803 = vmatpush1.msra.mxu0 0.0
      %804 = vmatprep.subr.mxu0 0.0
      %805 = vmatpush1.msra.mxu0 0.0
      %806 = vmatprep.subr.mxu0 0.0
      %807 = vmatpush1.msra.mxu0 0.0
      %808 = vmatprep.subr.mxu0 0.0
      %809 = vmatpush1.msra.mxu0 0.0
      %810 = vmatprep.subr.mxu0 0.0
      %811 = vmatpush1.msra.mxu0 0.0
      %812 = vmatprep.subr.mxu0 0.0
      %813 = vmatpush1.msra.mxu0 0.0
      %814 = vmatprep.subr.mxu0 0.0
      %815 = vmatpush1.msra.mxu0 0.0
      %816 = vmatprep.subr.mxu0 0.0
      %817 = vmatpush1.msra.mxu0 0.0
      %818 = vmatprep.subr.mxu0 0.0
      %819 = vmatpush1.msra.mxu0 0.0
      %820 = vmatprep.mubr.f32.mxu0 0.0
      %821 = vmatmul.mubr.f32.gmra.mrb[0].mxu0 %v754
      %v822 = vpop.f32.mrb[0].mxu0
      %v823 = vadd.f32 %v752, %v822
      %v824 = vpop.f32.mrb[0].mxu0
      %v825 = vadd.f32 %v752, %v824
      %826 = vdwg.mxu0
      %v827 = vmax.f32 %v823, 0.0
      %v828 = vmax.f32 %v825, 0.0
      %830 = vset.pattern.permute.xlu0 16
      %831 = vperm.xlu0 %830, %v217
      %v832 = vpop.permute.xlu0 %831
      %835 = vset.pattern.permute.xlu0 16
      %836 = vperm.xlu0 %835, %v218
      %v837 = vpop.permute.xlu0 %836
      %v839 = vsel %vm439, %v217, 0
      %v841 = vsel %vm439, %v218, 0
      %v844 = vsel %vm444, %v827, 0
      %v847 = vsel %vm444, %v828, 0
      %849 = vmatprep.subr.mxu0 %v847
      %850 = vmatpush1.msra.mxu0 %v844
      %851 = vmatprep.subr.mxu0 0.0
      %852 = vmatpush1.msra.mxu0 0.0
      %853 = vmatprep.subr.mxu0 0.0
      %854 = vmatpush1.msra.mxu0 0.0
      %855 = vmatprep.subr.mxu0 0.0
      %856 = vmatpush1.msra.mxu0 0.0
      %857 = vmatprep.subr.mxu0 0.0
      %858 = vmatpush1.msra.mxu0 0.0
      %859 = vmatprep.subr.mxu0 0.0
      %860 = vmatpush1.msra.mxu0 0.0
      %861 = vmatprep.subr.mxu0 0.0
      %862 = vmatpush1.msra.mxu0 0.0
      %863 = vmatprep.subr.mxu0 0.0
      %864 = vmatpush1.msra.mxu0 0.0
      %865 = vmatprep.subr.mxu0 0.0
      %866 = vmatpush1.msra.mxu0 0.0
      %867 = vmatprep.subr.mxu0 0.0
      %868 = vmatpush1.msra.mxu0 0.0
      %869 = vmatprep.subr.mxu0 0.0
      %870 = vmatpush1.msra.mxu0 0.0
      %871 = vmatprep.subr.mxu0 0.0
      %872 = vmatpush1.msra.mxu0 0.0
      %873 = vmatprep.subr.mxu0 0.0
      %874 = vmatpush1.msra.mxu0 0.0
      %875 = vmatprep.subr.mxu0 0.0
      %876 = vmatpush1.msra.mxu0 0.0
      %877 = vmatprep.subr.mxu0 0.0
      %878 = vmatpush1.msra.mxu0 0.0
      %879 = vmatprep.subr.mxu0 0.0
      %880 = vmatpush1.msra.mxu0 0.0
      %881 = vmatprep.subr.mxu0 0.0
      %882 = vmatpush1.msra.mxu0 0.0
      %883 = vmatprep.subr.mxu0 0.0
      %884 = vmatpush1.msra.mxu0 0.0
      %885 = vmatprep.subr.mxu0 0.0
      %886 = vmatpush1.msra.mxu0 0.0
      %887 = vmatprep.subr.mxu0 0.0
      %888 = vmatpush1.msra.mxu0 0.0
      %889 = vmatprep.subr.mxu0 0.0
      %890 = vmatpush1.msra.mxu0 0.0
      %891 = vmatprep.subr.mxu0 0.0
      %892 = vmatpush1.msra.mxu0 0.0
      %893 = vmatprep.subr.mxu0 0.0
      %894 = vmatpush1.msra.mxu0 0.0
      %895 = vmatprep.subr.mxu0 0.0
      %896 = vmatpush1.msra.mxu0 0.0
      %897 = vmatprep.subr.mxu0 0.0
      %898 = vmatpush1.msra.mxu0 0.0
      %899 = vmatprep.subr.mxu0 0.0
      %900 = vmatpush1.msra.mxu0 0.0
      %901 = vmatprep.subr.mxu0 0.0
      %902 = vmatpush1.msra.mxu0 0.0
      %903 = vmatprep.subr.mxu0 0.0
      %904 = vmatpush1.msra.mxu0 0.0
      %905 = vmatprep.subr.mxu0 0.0
      %906 = vmatpush1.msra.mxu0 0.0
      %907 = vmatprep.subr.mxu0 0.0
      %908 = vmatpush1.msra.mxu0 0.0
      %909 = vmatprep.subr.mxu0 0.0
      %910 = vmatpush1.msra.mxu0 0.0
      %911 = vmatprep.subr.mxu0 0.0
      %912 = vmatpush1.msra.mxu0 0.0
      %913 = vmatprep.mubr.f32.mxu0 0.0
      %914 = vmatmul.mubr.f32.gmra.mrb[0].mxu0 %v839
      %v915 = vpop.f32.mrb[0].mxu0
      %v916 = vadd.f32 %v832, %v915
      %v917 = vpop.f32.mrb[0].mxu0
      %v918 = vadd.f32 %v832, %v917
      %919 = vmatprep.mubr.f32.mxu0 0.0
      %920 = vmatmul.mubr.f32.gmra.mrb[0].mxu0 %v841
      %v921 = vpop.f32.mrb[0].mxu0
      %v922 = vadd.f32 %v837, %v921
      %v923 = vpop.f32.mrb[0].mxu0
      %v924 = vadd.f32 %v837, %v923
      %925 = vdwg.mxu0
      %v926 = vadd.f32 %v745, %v746
      %927 = vadd.xlane.f32.xlu0 %v926
      %v928 = vpop.xlane.xlu0 %927
      %v929 = vadd.f32 %v747, %v748
      %930 = vadd.xlane.f32.xlu0 %v929
      %v931 = vpop.xlane.xlu0 %930
      %v932 = vmul.f32 %v928, 0.00390625
      %v933 = vmul.f32 %v931, 0.00390625
      %934 = vmatprep.subr.mxu0 0.0
      %935 = vmatpush1.msra.mxu0 %v932
      %936 = vmatprep.subr.mxu0 0.0
      %937 = vmatpush1.msra.mxu0 %v933
      %938 = vmatprep.subr.mxu0 0.0
      %939 = vmatpush1.msra.mxu0 0.0
      %940 = vmatprep.subr.mxu0 0.0
      %941 = vmatpush1.msra.mxu0 0.0
      %942 = vmatprep.subr.mxu0 0.0
      %943 = vmatpush1.msra.mxu0 0.0
      %944 = vmatprep.subr.mxu0 0.0
      %945 = vmatpush1.msra.mxu0 0.0
      %946 = vmatprep.subr.mxu0 0.0
      %947 = vmatpush1.msra.mxu0 0.0
      %948 = vmatprep.subr.mxu0 0.0
      %949 = vmatpush1.msra.mxu0 0.0
      %950 = vmatprep.subr.mxu0 0.0
      %951 = vmatpush1.msra.mxu0 0.0
      %952 = vmatprep.subr.mxu0 0.0
      %953 = vmatpush1.msra.mxu0 0.0
      %954 = vmatprep.subr.mxu0 0.0
      %955 = vmatpush1.msra.mxu0 0.0
      %956 = vmatprep.subr.mxu0 0.0
      %957 = vmatpush1.msra.mxu0 0.0
      %958 = vmatprep.subr.mxu0 0.0
      %959 = vmatpush1.msra.mxu0 0.0
      %960 = vmatprep.subr.mxu0 0.0
      %961 = vmatpush1.msra.mxu0 0.0
      %962 = vmatprep.subr.mxu0 0.0
      %963 = vmatpush1.msra.mxu0 0.0
      %964 = vmatprep.subr.mxu0 0.0
      %965 = vmatpush1.msra.mxu0 0.0
      %966 = vmatprep.subr.mxu0 0.0
      %967 = vmatpush1.msra.mxu0 0.0
      %968 = vmatprep.subr.mxu0 0.0
      %969 = vmatpush1.msra.mxu0 0.0
      %970 = vmatprep.subr.mxu0 0.0
      %971 = vmatpush1.msra.mxu0 0.0
      %972 = vmatprep.subr.mxu0 0.0
      %973 = vmatpush1.msra.mxu0 0.0
      %974 = vmatprep.subr.mxu0 0.0
      %975 = vmatpush1.msra.mxu0 0.0
      %976 = vmatprep.subr.mxu0 0.0
      %977 = vmatpush1.msra.mxu0 0.0
      %978 = vmatprep.subr.mxu0 0.0
      %979 = vmatpush1.msra.mxu0 0.0
      %980 = vmatprep.subr.mxu0 0.0
      %981 = vmatpush1.msra.mxu0 0.0
      %982 = vmatprep.subr.mxu0 0.0
      %983 = vmatpush1.msra.mxu0 0.0
      %984 = vmatprep.subr.mxu0 0.0
      %985 = vmatpush1.msra.mxu0 0.0
      %986 = vmatprep.subr.mxu0 0.0
      %987 = vmatpush1.msra.mxu0 0.0
      %988 = vmatprep.subr.mxu0 0.0
      %989 = vmatpush1.msra.mxu0 0.0
      %990 = vmatprep.subr.mxu0 0.0
      %991 = vmatpush1.msra.mxu0 0.0
      %992 = vmatprep.subr.mxu0 0.0
      %993 = vmatpush1.msra.mxu0 0.0
      %994 = vmatprep.subr.mxu0 0.0
      %995 = vmatpush1.msra.mxu0 0.0
      %996 = vmatprep.subr.mxu0 0.0
      %997 = vmatpush1.msra.mxu0 0.0
      %998 = vmatprep.mubr.f32.mxu0 0.0
      %999 = vmatmul.mubr.f32.gmra.mrb[0].mxu0 %v540
      %v1000 = vpop.f32.mrb[0].mxu0
      %v1001 = vadd.f32 %v538, %v1000
      %v1002 = vpop.f32.mrb[0].mxu0
      %1003 = vdwg.mxu0
      %v1004 = vmax.f32 %v1001, 0.0
      %v1006 = vsel %vm444, %v1004, 0
      %1008 = vmatprep.subr.mxu0 0.0
      %1009 = vmatpush1.msra.mxu0 %v1006
      %1010 = vmatprep.subr.mxu0 0.0
      %1011 = vmatpush1.msra.mxu0 0.0
      %1012 = vmatprep.subr.mxu0 0.0
      %1013 = vmatpush1.msra.mxu0 0.0
      %1014 = vmatprep.subr.mxu0 0.0
      %1015 = vmatpush1.msra.mxu0 0.0
      %1016 = vmatprep.subr.mxu0 0.0
      %1017 = vmatpush1.msra.mxu0 0.0
      %1018 = vmatprep.subr.mxu0 0.0
      %1019 = vmatpush1.msra.mxu0 0.0
      %1020 = vmatprep.subr.mxu0 0.0
      %1021 = vmatpush1.msra.mxu0 0.0
      %1022 = vmatprep.subr.mxu0 0.0
      %1023 = vmatpush1.msra.mxu0 0.0
      %1024 = vmatprep.subr.mxu0 0.0
      %1025 = vmatpush1.msra.mxu0 0.0
      %1026 = vmatprep.subr.mxu0 0.0
      %1027 = vmatpush1.msra.mxu0 0.0
      %1028 = vmatprep.subr.mxu0 0.0
      %1029 = vmatpush1.msra.mxu0 0.0
      %1030 = vmatprep.subr.mxu0 0.0
      %1031 = vmatpush1.msra.mxu0 0.0
      %1032 = vmatprep.subr.mxu0 0.0
      %1033 = vmatpush1.msra.mxu0 0.0
      %1034 = vmatprep.subr.mxu0 0.0
      %1035 = vmatpush1.msra.mxu0 0.0
      %1036 = vmatprep.subr.mxu0 0.0
      %1037 = vmatpush1.msra.mxu0 0.0
      %1038 = vmatprep.subr.mxu0 0.0
      %1039 = vmatpush1.msra.mxu0 0.0
      %1040 = vmatprep.subr.mxu0 0.0
      %1041 = vmatpush1.msra.mxu0 0.0
      %1042 = vmatprep.subr.mxu0 0.0
      %1043 = vmatpush1.msra.mxu0 0.0
      %1044 = vmatprep.subr.mxu0 0.0
      %1045 = vmatpush1.msra.mxu0 0.0
      %1046 = vmatprep.subr.mxu0 0.0
      %1047 = vmatpush1.msra.mxu0 0.0
      %1048 = vmatprep.subr.mxu0 0.0
      %1049 = vmatpush1.msra.mxu0 0.0
      %1050 = vmatprep.subr.mxu0 0.0
      %1051 = vmatpush1.msra.mxu0 0.0
      %1052 = vmatprep.subr.mxu0 0.0
      %1053 = vmatpush1.msra.mxu0 0.0
      %1054 = vmatprep.subr.mxu0 0.0
      %1055 = vmatpush1.msra.mxu0 0.0
      %1056 = vmatprep.subr.mxu0 0.0
      %1057 = vmatpush1.msra.mxu0 0.0
      %1058 = vmatprep.subr.mxu0 0.0
      %1059 = vmatpush1.msra.mxu0 0.0
      %1060 = vmatprep.subr.mxu0 0.0
      %1061 = vmatpush1.msra.mxu0 0.0
      %1062 = vmatprep.subr.mxu0 0.0
      %1063 = vmatpush1.msra.mxu0 0.0
      %1064 = vmatprep.subr.mxu0 0.0
      %1065 = vmatpush1.msra.mxu0 0.0
      %1066 = vmatprep.subr.mxu0 0.0
      %1067 = vmatpush1.msra.mxu0 0.0
      %1068 = vmatprep.subr.mxu0 0.0
      %1069 = vmatpush1.msra.mxu0 0.0
      %1070 = vmatprep.subr.mxu0 0.0
      %1071 = vmatpush1.msra.mxu0 0.0
      %1072 = vmatprep.mubr.f32.mxu0 0.0
      %1073 = vmatmul.mubr.f32.gmra.mrb[0].mxu0 %v621
      %v1074 = vpop.f32.mrb[0].mxu0
      %v1075 = vadd.f32 %v616, %v1074
      %v1076 = vpop.f32.mrb[0].mxu0
      %1077 = vmatprep.mubr.f32.mxu0 0.0
      %1078 = vmatmul.mubr.f32.gmra.mrb[0].mxu0 %v623
      %v1079 = vpop.f32.mrb[0].mxu0
      %v1080 = vadd.f32 %v618, %v1079
      %v1081 = vpop.f32.mrb[0].mxu0
      %1082 = vdwg.mxu0
      %1084 = vset.pattern.permute.xlu0 0
      %1085 = vperm.xlu0 %1084, %v1075
      %v1086 = vpop.permute.xlu0 %1085
      %1089 = vset.pattern.permute.xlu0 0
      %1090 = vperm.xlu0 %1089, %v1080
      %v1091 = vpop.permute.xlu0 %1090
      %v1093 = vadd.f32 %v916, %v1086
      %v1094 = vadd.f32 %v918, %v1086
      %v1095 = vadd.f32 %v922, %v1091
      %v1096 = vadd.f32 %v924, %v1091
      %v1097 = vmul.f32 %v1093, 0.5
      %v1098 = vmul.f32 %v1094, 0.5
      %v1099 = vmul.f32 %v1095, 0.5
      %v1100 = vmul.f32 %v1096, 0.5
      %v1101 = vtanh.pop %v1097
      %v1102 = vtanh.pop %v1098
      %v1103 = vtanh.pop %v1099
      %v1104 = vtanh.pop %v1100
      %v1105 = vadd.f32 %v1101, 1.0
      %v1106 = vadd.f32 %v1102, 1.0
      %v1107 = vadd.f32 %v1103, 1.0
      %v1108 = vadd.f32 %v1104, 1.0
      %v1109 = vmul.f32 %v1105, 0.5
      %v1110 = vmul.f32 %v1106, 0.5
      %v1111 = vmul.f32 %v1107, 0.5
      %v1112 = vmul.f32 %v1108, 0.5
      %v1113 = vmul.f32 %v323, %v1109
      %v1114 = vmul.f32 %v325, %v1110
      %v1115 = vmul.f32 %v329, %v1111
      %v1116 = vmul.f32 %v331, %v1112
      %v1117 = vsub.f32 1.0, %v1109
      %v1118 = vsub.f32 1.0, %v1110
      %v1119 = vsub.f32 1.0, %v1111
      %v1120 = vsub.f32 1.0, %v1112
      %v1121 = vmul.f32 %v335, %v1117
      %v1122 = vmul.f32 %v337, %v1118
      %v1123 = vmul.f32 %v341, %v1119
      %v1124 = vmul.f32 %v343, %v1120
      %v1125 = vadd.f32 %v1113, %v1121
      %v1126 = vadd.f32 %v1114, %v1122
      %v1127 = vadd.f32 %v1115, %v1123
      %v1128 = vadd.f32 %v1116, %v1124
      %1129 = vst [vmem:[%s202] sm:$0xff] %v1125
      %1130 = vst [vmem:[%s202 + $0x8] sm:$0xff] %v1126
      %1131 = vst [vmem:[%s202 + $0x10] sm:$0xff] %v1127
      %1132 = vst [vmem:[%s202 + $0x18] sm:$0xff] %v1128
      %s1133 = scalar_lea.vmem %s188, 16
      %v1134 = vld [vmem:[%s1133] sm:$0xff]
      %v1135 = vld [vmem:[%s1133 + $0x8] sm:$0xff]
      %s1136 = scalar_lea.vmem %s195, 16
      %v1137 = vld [vmem:[%s1136] sm:$0xff]
      %v1138 = vld [vmem:[%s1136 + $0x8] sm:$0xff]
      %v1139 = vld [vmem:[%s2] sm:$0xff]
      %v1140 = vld [vmem:[%s2 + $0x8] sm:$0xff]
      %v1141 = vld [vmem:[%s2 + $0x10] sm:$0xff]
      %v1142 = vld [vmem:[%s2 + $0x18] sm:$0xff]
      %1144 = vset.pattern.permute.xlu0 16
      %1145 = vperm.xlu0 %1144, %v1139
      %v1146 = vpop.permute.xlu0 %1145
      %1149 = vset.pattern.permute.xlu0 16
      %1150 = vperm.xlu0 %1149, %v1140
      %v1151 = vpop.permute.xlu0 %1150
      %1154 = vset.pattern.permute.xlu0 16
      %1155 = vperm.xlu0 %1154, %v1141
      %v1156 = vpop.permute.xlu0 %1155
      %1159 = vset.pattern.permute.xlu0 16
      %1160 = vperm.xlu0 %1159, %v1142
      %v1161 = vpop.permute.xlu0 %1160
      %v1163 = vsel %vm247, %v1139, 0
      %v1165 = vsel %vm247, %v1140, 0
      %v1167 = vsel %vm247, %v1141, 0
      %v1169 = vsel %vm247, %v1142, 0
      %1171 = vmatprep.subr.mxu0 %v1135
      %1172 = vmatpush1.msra.mxu0 %v1134
      %1173 = vmatprep.subr.mxu0 %v1138
      %1174 = vmatpush1.msra.mxu0 %v1137
      %1175 = vmatprep.subr.mxu0 0.0
      %1176 = vmatpush1.msra.mxu0 0.0
      %1177 = vmatprep.subr.mxu0 0.0
      %1178 = vmatpush1.msra.mxu0 0.0
      %1179 = vmatprep.subr.mxu0 0.0
      %1180 = vmatpush1.msra.mxu0 0.0
      %1181 = vmatprep.subr.mxu0 0.0
      %1182 = vmatpush1.msra.mxu0 0.0
      %1183 = vmatprep.subr.mxu0 0.0
      %1184 = vmatpush1.msra.mxu0 0.0
      %1185 = vmatprep.subr.mxu0 0.0
      %1186 = vmatpush1.msra.mxu0 0.0
      %1187 = vmatprep.subr.mxu0 0.0
      %1188 = vmatpush1.msra.mxu0 0.0
      %1189 = vmatprep.subr.mxu0 0.0
      %1190 = vmatpush1.msra.mxu0 0.0
      %1191 = vmatprep.subr.mxu0 0.0
      %1192 = vmatpush1.msra.mxu0 0.0
      %1193 = vmatprep.subr.mxu0 0.0
      %1194 = vmatpush1.msra.mxu0 0.0
      %1195 = vmatprep.subr.mxu0 0.0
      %1196 = vmatpush1.msra.mxu0 0.0
      %1197 = vmatprep.subr.mxu0 0.0
      %1198 = vmatpush1.msra.mxu0 0.0
      %1199 = vmatprep.subr.mxu0 0.0
      %1200 = vmatpush1.msra.mxu0 0.0
      %1201 = vmatprep.subr.mxu0 0.0
      %1202 = vmatpush1.msra.mxu0 0.0
      %1203 = vmatprep.subr.mxu0 0.0
      %1204 = vmatpush1.msra.mxu0 0.0
      %1205 = vmatprep.subr.mxu0 0.0
      %1206 = vmatpush1.msra.mxu0 0.0
      %1207 = vmatprep.subr.mxu0 0.0
      %1208 = vmatpush1.msra.mxu0 0.0
      %1209 = vmatprep.subr.mxu0 0.0
      %1210 = vmatpush1.msra.mxu0 0.0
      %1211 = vmatprep.subr.mxu0 0.0
      %1212 = vmatpush1.msra.mxu0 0.0
      %1213 = vmatprep.subr.mxu0 0.0
      %1214 = vmatpush1.msra.mxu0 0.0
      %1215 = vmatprep.subr.mxu0 0.0
      %1216 = vmatpush1.msra.mxu0 0.0
      %1217 = vmatprep.subr.mxu0 0.0
      %1218 = vmatpush1.msra.mxu0 0.0
      %1219 = vmatprep.subr.mxu0 0.0
      %1220 = vmatpush1.msra.mxu0 0.0
      %1221 = vmatprep.subr.mxu0 0.0
      %1222 = vmatpush1.msra.mxu0 0.0
      %1223 = vmatprep.subr.mxu0 0.0
      %1224 = vmatpush1.msra.mxu0 0.0
      %1225 = vmatprep.subr.mxu0 0.0
      %1226 = vmatpush1.msra.mxu0 0.0
      %1227 = vmatprep.subr.mxu0 0.0
      %1228 = vmatpush1.msra.mxu0 0.0
      %1229 = vmatprep.subr.mxu0 0.0
      %1230 = vmatpush1.msra.mxu0 0.0
      %1231 = vmatprep.subr.mxu0 0.0
      %1232 = vmatpush1.msra.mxu0 0.0
      %1233 = vmatprep.subr.mxu0 0.0
      %1234 = vmatpush1.msra.mxu0 0.0
      %1235 = vmatprep.mubr.f32.mxu0 0.0
      %1236 = vmatmul.mubr.f32.gmra.mrb[0].mxu0 %v1163
      %v1237 = vpop.f32.mrb[0].mxu0
      %v1238 = vadd.f32 %v1146, %v1237
      %v1239 = vpop.f32.mrb[0].mxu0
      %v1240 = vadd.f32 %v1146, %v1239
      %1241 = vmatprep.mubr.f32.mxu0 0.0
      %1242 = vmatmul.mubr.f32.gmra.mrb[0].mxu0 %v1165
      %v1243 = vpop.f32.mrb[0].mxu0
      %v1244 = vadd.f32 %v1151, %v1243
      %v1245 = vpop.f32.mrb[0].mxu0
      %v1246 = vadd.f32 %v1151, %v1245
      %1247 = vmatprep.mubr.f32.mxu0 0.0
      %1248 = vmatmul.mubr.f32.gmra.mrb[0].mxu0 %v1167
      %v1249 = vpop.f32.mrb[0].mxu0
      %v1250 = vadd.f32 %v1156, %v1249
      %v1251 = vpop.f32.mrb[0].mxu0
      %v1252 = vadd.f32 %v1156, %v1251
      %1253 = vmatprep.mubr.f32.mxu0 0.0
      %1254 = vmatmul.mubr.f32.gmra.mrb[0].mxu0 %v1169
      %v1255 = vpop.f32.mrb[0].mxu0
      %v1256 = vadd.f32 %v1161, %v1255
      %v1257 = vpop.f32.mrb[0].mxu0
      %v1258 = vadd.f32 %v1161, %v1257
      %1259 = vdwg.mxu0
      %v1260 = vadd.f32 %v1238, %v1250
      %v1261 = vadd.f32 %v1240, %v1252
      %v1262 = vadd.f32 %v1244, %v1256
      %v1263 = vadd.f32 %v1246, %v1258
      %1264 = vmatprep.subr.mxu0 %v1261
      %1265 = vmatpush1.msra.mxu0 %v1260
      %1266 = vmatprep.subr.mxu0 %v1263
      %1267 = vmatpush1.msra.mxu0 %v1262
      %1268 = vmatprep.subr.mxu0 0.0
      %1269 = vmatpush1.msra.mxu0 0.0
      %1270 = vmatprep.subr.mxu0 0.0
      %1271 = vmatpush1.msra.mxu0 0.0
      %1272 = vmatprep.subr.mxu0 0.0
      %1273 = vmatpush1.msra.mxu0 0.0
      %1274 = vmatprep.subr.mxu0 0.0
      %1275 = vmatpush1.msra.mxu0 0.0
      %1276 = vmatprep.subr.mxu0 0.0
      %1277 = vmatpush1.msra.mxu0 0.0
      %1278 = vmatprep.subr.mxu0 0.0
      %1279 = vmatpush1.msra.mxu0 0.0
      %1280 = vmatprep.subr.mxu0 0.0
      %1281 = vmatpush1.msra.mxu0 0.0
      %1282 = vmatprep.subr.mxu0 0.0
      %1283 = vmatpush1.msra.mxu0 0.0
      %1284 = vmatprep.subr.mxu0 0.0
      %1285 = vmatpush1.msra.mxu0 0.0
      %1286 = vmatprep.subr.mxu0 0.0
      %1287 = vmatpush1.msra.mxu0 0.0
      %1288 = vmatprep.subr.mxu0 0.0
      %1289 = vmatpush1.msra.mxu0 0.0
      %1290 = vmatprep.subr.mxu0 0.0
      %1291 = vmatpush1.msra.mxu0 0.0
      %1292 = vmatprep.subr.mxu0 0.0
      %1293 = vmatpush1.msra.mxu0 0.0
      %1294 = vmatprep.subr.mxu0 0.0
      %1295 = vmatpush1.msra.mxu0 0.0
      %1296 = vmatprep.subr.mxu0 0.0
      %1297 = vmatpush1.msra.mxu0 0.0
      %1298 = vmatprep.subr.mxu0 0.0
      %1299 = vmatpush1.msra.mxu0 0.0
      %1300 = vmatprep.subr.mxu0 0.0
      %1301 = vmatpush1.msra.mxu0 0.0
      %1302 = vmatprep.subr.mxu0 0.0
      %1303 = vmatpush1.msra.mxu0 0.0
      %1304 = vmatprep.subr.mxu0 0.0
      %1305 = vmatpush1.msra.mxu0 0.0
      %1306 = vmatprep.subr.mxu0 0.0
      %1307 = vmatpush1.msra.mxu0 0.0
      %1308 = vmatprep.subr.mxu0 0.0
      %1309 = vmatpush1.msra.mxu0 0.0
      %1310 = vmatprep.subr.mxu0 0.0
      %1311 = vmatpush1.msra.mxu0 0.0
      %1312 = vmatprep.subr.mxu0 0.0
      %1313 = vmatpush1.msra.mxu0 0.0
      %1314 = vmatprep.subr.mxu0 0.0
      %1315 = vmatpush1.msra.mxu0 0.0
      %1316 = vmatprep.subr.mxu0 0.0
      %1317 = vmatpush1.msra.mxu0 0.0
      %1318 = vmatprep.subr.mxu0 0.0
      %1319 = vmatpush1.msra.mxu0 0.0
      %1320 = vmatprep.subr.mxu0 0.0
      %1321 = vmatpush1.msra.mxu0 0.0
      %1322 = vmatprep.subr.mxu0 0.0
      %1323 = vmatpush1.msra.mxu0 0.0
      %1324 = vmatprep.subr.mxu0 0.0
      %1325 = vmatpush1.msra.mxu0 0.0
      %1326 = vmatprep.subr.mxu0 0.0
      %1327 = vmatpush1.msra.mxu0 0.0
      %1328 = vmatprep.mubr.f32.mxu0 0.0
      %1329 = vmatmul.mubr.f32.gmra.mrb[0].mxu0 %v354
      %v1330 = vpop.f32.mrb[0].mxu0
      %v1331 = vadd.f32 %v352, %v1330
      %v1332 = vpop.f32.mrb[0].mxu0
      %v1333 = vadd.f32 %v352, %v1332
      %1334 = vdwg.mxu0
      %v1335 = vmax.f32 %v1331, 0.0
      %v1336 = vmax.f32 %v1333, 0.0
      %v1338 = vsel %vm444, %v1335, 0
      %v1341 = vsel %vm444, %v1336, 0
      %1343 = vmatprep.subr.mxu0 %v1341
      %1344 = vmatpush1.msra.mxu0 %v1338
      %1345 = vmatprep.subr.mxu0 0.0
      %1346 = vmatpush1.msra.mxu0 0.0
      %1347 = vmatprep.subr.mxu0 0.0
      %1348 = vmatpush1.msra.mxu0 0.0
      %1349 = vmatprep.subr.mxu0 0.0
      %1350 = vmatpush1.msra.mxu0 0.0
      %1351 = vmatprep.subr.mxu0 0.0
      %1352 = vmatpush1.msra.mxu0 0.0
      %1353 = vmatprep.subr.mxu0 0.0
      %1354 = vmatpush1.msra.mxu0 0.0
      %1355 = vmatprep.subr.mxu0 0.0
      %1356 = vmatpush1.msra.mxu0 0.0
      %1357 = vmatprep.subr.mxu0 0.0
      %1358 = vmatpush1.msra.mxu0 0.0
      %1359 = vmatprep.subr.mxu0 0.0
      %1360 = vmatpush1.msra.mxu0 0.0
      %1361 = vmatprep.subr.mxu0 0.0
      %1362 = vmatpush1.msra.mxu0 0.0
      %1363 = vmatprep.subr.mxu0 0.0
      %1364 = vmatpush1.msra.mxu0 0.0
      %1365 = vmatprep.subr.mxu0 0.0
      %1366 = vmatpush1.msra.mxu0 0.0
      %1367 = vmatprep.subr.mxu0 0.0
      %1368 = vmatpush1.msra.mxu0 0.0
      %1369 = vmatprep.subr.mxu0 0.0
      %1370 = vmatpush1.msra.mxu0 0.0
      %1371 = vmatprep.subr.mxu0 0.0
      %1372 = vmatpush1.msra.mxu0 0.0
      %1373 = vmatprep.subr.mxu0 0.0
      %1374 = vmatpush1.msra.mxu0 0.0
      %1375 = vmatprep.subr.mxu0 0.0
      %1376 = vmatpush1.msra.mxu0 0.0
      %1377 = vmatprep.subr.mxu0 0.0
      %1378 = vmatpush1.msra.mxu0 0.0
      %1379 = vmatprep.subr.mxu0 0.0
      %1380 = vmatpush1.msra.mxu0 0.0
      %1381 = vmatprep.subr.mxu0 0.0
      %1382 = vmatpush1.msra.mxu0 0.0
      %1383 = vmatprep.subr.mxu0 0.0
      %1384 = vmatpush1.msra.mxu0 0.0
      %1385 = vmatprep.subr.mxu0 0.0
      %1386 = vmatpush1.msra.mxu0 0.0
      %1387 = vmatprep.subr.mxu0 0.0
      %1388 = vmatpush1.msra.mxu0 0.0
      %1389 = vmatprep.subr.mxu0 0.0
      %1390 = vmatpush1.msra.mxu0 0.0
      %1391 = vmatprep.subr.mxu0 0.0
      %1392 = vmatpush1.msra.mxu0 0.0
      %1393 = vmatprep.subr.mxu0 0.0
      %1394 = vmatpush1.msra.mxu0 0.0
      %1395 = vmatprep.subr.mxu0 0.0
      %1396 = vmatpush1.msra.mxu0 0.0
      %1397 = vmatprep.subr.mxu0 0.0
      %1398 = vmatpush1.msra.mxu0 0.0
      %1399 = vmatprep.subr.mxu0 0.0
      %1400 = vmatpush1.msra.mxu0 0.0
      %1401 = vmatprep.subr.mxu0 0.0
      %1402 = vmatpush1.msra.mxu0 0.0
      %1403 = vmatprep.subr.mxu0 0.0
      %1404 = vmatpush1.msra.mxu0 0.0
      %1405 = vmatprep.subr.mxu0 0.0
      %1406 = vmatpush1.msra.mxu0 0.0
      %1407 = vmatprep.mubr.f32.mxu0 0.0
      %1408 = vmatmul.mubr.f32.gmra.mrb[0].mxu0 %v440
      %v1409 = vpop.f32.mrb[0].mxu0
      %v1410 = vadd.f32 %v432, %v1409
      %v1411 = vpop.f32.mrb[0].mxu0
      %v1412 = vadd.f32 %v432, %v1411
      %1413 = vmatprep.mubr.f32.mxu0 0.0
      %1414 = vmatmul.mubr.f32.gmra.mrb[0].mxu0 %v442
      %v1415 = vpop.f32.mrb[0].mxu0
      %v1416 = vadd.f32 %v437, %v1415
      %v1417 = vpop.f32.mrb[0].mxu0
      %v1418 = vadd.f32 %v437, %v1417
      %1419 = vdwg.mxu0
      %v1420 = vadd.f32 %v1260, %v1261
      %1421 = vadd.xlane.f32.xlu0 %v1420
      %v1422 = vpop.xlane.xlu0 %1421
      %v1423 = vadd.f32 %v1262, %v1263
      %1424 = vadd.xlane.f32.xlu0 %v1423
      %v1425 = vpop.xlane.xlu0 %1424
      %v1426 = vmul.f32 %v1422, 0.00390625
      %v1427 = vmul.f32 %v1425, 0.00390625
      %1428 = vmatprep.subr.mxu0 0.0
      %1429 = vmatpush1.msra.mxu0 %v1426
      %1430 = vmatprep.subr.mxu0 0.0
      %1431 = vmatpush1.msra.mxu0 %v1427
      %1432 = vmatprep.subr.mxu0 0.0
      %1433 = vmatpush1.msra.mxu0 0.0
      %1434 = vmatprep.subr.mxu0 0.0
      %1435 = vmatpush1.msra.mxu0 0.0
      %1436 = vmatprep.subr.mxu0 0.0
      %1437 = vmatpush1.msra.mxu0 0.0
      %1438 = vmatprep.subr.mxu0 0.0
      %1439 = vmatpush1.msra.mxu0 0.0
      %1440 = vmatprep.subr.mxu0 0.0
      %1441 = vmatpush1.msra.mxu0 0.0
      %1442 = vmatprep.subr.mxu0 0.0
      %1443 = vmatpush1.msra.mxu0 0.0
      %1444 = vmatprep.subr.mxu0 0.0
      %1445 = vmatpush1.msra.mxu0 0.0
      %1446 = vmatprep.subr.mxu0 0.0
      %1447 = vmatpush1.msra.mxu0 0.0
      %1448 = vmatprep.subr.mxu0 0.0
      %1449 = vmatpush1.msra.mxu0 0.0
      %1450 = vmatprep.subr.mxu0 0.0
      %1451 = vmatpush1.msra.mxu0 0.0
      %1452 = vmatprep.subr.mxu0 0.0
      %1453 = vmatpush1.msra.mxu0 0.0
      %1454 = vmatprep.subr.mxu0 0.0
      %1455 = vmatpush1.msra.mxu0 0.0
      %1456 = vmatprep.subr.mxu0 0.0
      %1457 = vmatpush1.msra.mxu0 0.0
      %1458 = vmatprep.subr.mxu0 0.0
      %1459 = vmatpush1.msra.mxu0 0.0
      %1460 = vmatprep.subr.mxu0 0.0
      %1461 = vmatpush1.msra.mxu0 0.0
      %1462 = vmatprep.subr.mxu0 0.0
      %1463 = vmatpush1.msra.mxu0 0.0
      %1464 = vmatprep.subr.mxu0 0.0
      %1465 = vmatpush1.msra.mxu0 0.0
      %1466 = vmatprep.subr.mxu0 0.0
      %1467 = vmatpush1.msra.mxu0 0.0
      %1468 = vmatprep.subr.mxu0 0.0
      %1469 = vmatpush1.msra.mxu0 0.0
      %1470 = vmatprep.subr.mxu0 0.0
      %1471 = vmatpush1.msra.mxu0 0.0
      %1472 = vmatprep.subr.mxu0 0.0
      %1473 = vmatpush1.msra.mxu0 0.0
      %1474 = vmatprep.subr.mxu0 0.0
      %1475 = vmatpush1.msra.mxu0 0.0
      %1476 = vmatprep.subr.mxu0 0.0
      %1477 = vmatpush1.msra.mxu0 0.0
      %1478 = vmatprep.subr.mxu0 0.0
      %1479 = vmatpush1.msra.mxu0 0.0
      %1480 = vmatprep.subr.mxu0 0.0
      %1481 = vmatpush1.msra.mxu0 0.0
      %1482 = vmatprep.subr.mxu0 0.0
      %1483 = vmatpush1.msra.mxu0 0.0
      %1484 = vmatprep.subr.mxu0 0.0
      %1485 = vmatpush1.msra.mxu0 0.0
      %1486 = vmatprep.subr.mxu0 0.0
      %1487 = vmatpush1.msra.mxu0 0.0
      %1488 = vmatprep.subr.mxu0 0.0
      %1489 = vmatpush1.msra.mxu0 0.0
      %1490 = vmatprep.subr.mxu0 0.0
      %1491 = vmatpush1.msra.mxu0 0.0
      %1492 = vmatprep.mubr.f32.mxu0 0.0
      %1493 = vmatmul.mubr.f32.gmra.mrb[0].mxu0 %v540
      %v1494 = vpop.f32.mrb[0].mxu0
      %v1495 = vadd.f32 %v538, %v1494
      %v1496 = vpop.f32.mrb[0].mxu0
      %1497 = vdwg.mxu0
      %v1498 = vmax.f32 %v1495, 0.0
      %v1500 = vsel %vm444, %v1498, 0
      %1502 = vmatprep.subr.mxu0 0.0
      %1503 = vmatpush1.msra.mxu0 %v1500
      %1504 = vmatprep.subr.mxu0 0.0
      %1505 = vmatpush1.msra.mxu0 0.0
      %1506 = vmatprep.subr.mxu0 0.0
      %1507 = vmatpush1.msra.mxu0 0.0
      %1508 = vmatprep.subr.mxu0 0.0
      %1509 = vmatpush1.msra.mxu0 0.0
      %1510 = vmatprep.subr.mxu0 0.0
      %1511 = vmatpush1.msra.mxu0 0.0
      %1512 = vmatprep.subr.mxu0 0.0
      %1513 = vmatpush1.msra.mxu0 0.0
      %1514 = vmatprep.subr.mxu0 0.0
      %1515 = vmatpush1.msra.mxu0 0.0
      %1516 = vmatprep.subr.mxu0 0.0
      %1517 = vmatpush1.msra.mxu0 0.0
      %1518 = vmatprep.subr.mxu0 0.0
      %1519 = vmatpush1.msra.mxu0 0.0
      %1520 = vmatprep.subr.mxu0 0.0
      %1521 = vmatpush1.msra.mxu0 0.0
      %1522 = vmatprep.subr.mxu0 0.0
      %1523 = vmatpush1.msra.mxu0 0.0
      %1524 = vmatprep.subr.mxu0 0.0
      %1525 = vmatpush1.msra.mxu0 0.0
      %1526 = vmatprep.subr.mxu0 0.0
      %1527 = vmatpush1.msra.mxu0 0.0
      %1528 = vmatprep.subr.mxu0 0.0
      %1529 = vmatpush1.msra.mxu0 0.0
      %1530 = vmatprep.subr.mxu0 0.0
      %1531 = vmatpush1.msra.mxu0 0.0
      %1532 = vmatprep.subr.mxu0 0.0
      %1533 = vmatpush1.msra.mxu0 0.0
      %1534 = vmatprep.subr.mxu0 0.0
      %1535 = vmatpush1.msra.mxu0 0.0
      %1536 = vmatprep.subr.mxu0 0.0
      %1537 = vmatpush1.msra.mxu0 0.0
      %1538 = vmatprep.subr.mxu0 0.0
      %1539 = vmatpush1.msra.mxu0 0.0
      %1540 = vmatprep.subr.mxu0 0.0
      %1541 = vmatpush1.msra.mxu0 0.0
      %1542 = vmatprep.subr.mxu0 0.0
      %1543 = vmatpush1.msra.mxu0 0.0
      %1544 = vmatprep.subr.mxu0 0.0
      %1545 = vmatpush1.msra.mxu0 0.0
      %1546 = vmatprep.subr.mxu0 0.0
      %1547 = vmatpush1.msra.mxu0 0.0
      %1548 = vmatprep.subr.mxu0 0.0
      %1549 = vmatpush1.msra.mxu0 0.0
      %1550 = vmatprep.subr.mxu0 0.0
      %1551 = vmatpush1.msra.mxu0 0.0
      %1552 = vmatprep.subr.mxu0 0.0
      %1553 = vmatpush1.msra.mxu0 0.0
      %1554 = vmatprep.subr.mxu0 0.0
      %1555 = vmatpush1.msra.mxu0 0.0
      %1556 = vmatprep.subr.mxu0 0.0
      %1557 = vmatpush1.msra.mxu0 0.0
      %1558 = vmatprep.subr.mxu0 0.0
      %1559 = vmatpush1.msra.mxu0 0.0
      %1560 = vmatprep.subr.mxu0 0.0
      %1561 = vmatpush1.msra.mxu0 0.0
      %1562 = vmatprep.subr.mxu0 0.0
      %1563 = vmatpush1.msra.mxu0 0.0
      %1564 = vmatprep.subr.mxu0 0.0
      %1565 = vmatpush1.msra.mxu0 0.0
      %1566 = vmatprep.mubr.f32.mxu0 0.0
      %1567 = vmatmul.mubr.f32.gmra.mrb[0].mxu0 %v621
      %v1568 = vpop.f32.mrb[0].mxu0
      %v1569 = vadd.f32 %v616, %v1568
      %v1570 = vpop.f32.mrb[0].mxu0
      %1571 = vmatprep.mubr.f32.mxu0 0.0
      %1572 = vmatmul.mubr.f32.gmra.mrb[0].mxu0 %v623
      %v1573 = vpop.f32.mrb[0].mxu0
      %v1574 = vadd.f32 %v618, %v1573
      %v1575 = vpop.f32.mrb[0].mxu0
      %1576 = vdwg.mxu0
      %1578 = vset.pattern.permute.xlu0 0
      %1579 = vperm.xlu0 %1578, %v1569
      %v1580 = vpop.permute.xlu0 %1579
      %1583 = vset.pattern.permute.xlu0 0
      %1584 = vperm.xlu0 %1583, %v1574
      %v1585 = vpop.permute.xlu0 %1584
      %v1587 = vadd.f32 %v1410, %v1580
      %v1588 = vadd.f32 %v1412, %v1580
      %v1589 = vadd.f32 %v1416, %v1585
      %v1590 = vadd.f32 %v1418, %v1585
      %v1591 = vmul.f32 %v1587, 0.5
      %v1592 = vmul.f32 %v1588, 0.5
      %v1593 = vmul.f32 %v1589, 0.5
      %v1594 = vmul.f32 %v1590, 0.5
      %v1595 = vtanh.pop %v1591
      %v1596 = vtanh.pop %v1592
      %v1597 = vtanh.pop %v1593
      %v1598 = vtanh.pop %v1594
      %v1599 = vadd.f32 %v1595, 1.0
      %v1600 = vadd.f32 %v1596, 1.0
      %v1601 = vadd.f32 %v1597, 1.0
      %v1602 = vadd.f32 %v1598, 1.0
      %v1603 = vmul.f32 %v1599, 0.5
      %v1604 = vmul.f32 %v1600, 0.5
      %v1605 = vmul.f32 %v1601, 0.5
      %v1606 = vmul.f32 %v1602, 0.5
      %v1607 = vmul.f32 %v1238, %v1603
      %v1608 = vmul.f32 %v1240, %v1604
      %v1609 = vmul.f32 %v1244, %v1605
      %v1610 = vmul.f32 %v1246, %v1606
      %v1611 = vsub.f32 1.0, %v1603
      %v1612 = vsub.f32 1.0, %v1604
      %v1613 = vsub.f32 1.0, %v1605
      %v1614 = vsub.f32 1.0, %v1606
      %v1615 = vmul.f32 %v1250, %v1611
      %v1616 = vmul.f32 %v1252, %v1612
      %v1617 = vmul.f32 %v1256, %v1613
      %v1618 = vmul.f32 %v1258, %v1614
      %v1619 = vadd.f32 %v1607, %v1615
      %v1620 = vadd.f32 %v1608, %v1616
      %v1621 = vadd.f32 %v1609, %v1617
      %v1622 = vadd.f32 %v1610, %v1618
      %1623 = vmatprep.subr.mxu0 %v1620
      %1624 = vmatpush1.msra.mxu0 %v1619
      %1625 = vmatprep.subr.mxu0 %v1622
      %1626 = vmatpush1.msra.mxu0 %v1621
      %1627 = vmatprep.subr.mxu0 0.0
      %1628 = vmatpush1.msra.mxu0 0.0
      %1629 = vmatprep.subr.mxu0 0.0
      %1630 = vmatpush1.msra.mxu0 0.0
      %1631 = vmatprep.subr.mxu0 0.0
      %1632 = vmatpush1.msra.mxu0 0.0
      %1633 = vmatprep.subr.mxu0 0.0
      %1634 = vmatpush1.msra.mxu0 0.0
      %1635 = vmatprep.subr.mxu0 0.0
      %1636 = vmatpush1.msra.mxu0 0.0
      %1637 = vmatprep.subr.mxu0 0.0
      %1638 = vmatpush1.msra.mxu0 0.0
      %1639 = vmatprep.subr.mxu0 0.0
      %1640 = vmatpush1.msra.mxu0 0.0
      %1641 = vmatprep.subr.mxu0 0.0
      %1642 = vmatpush1.msra.mxu0 0.0
      %1643 = vmatprep.subr.mxu0 0.0
      %1644 = vmatpush1.msra.mxu0 0.0
      %1645 = vmatprep.subr.mxu0 0.0
      %1646 = vmatpush1.msra.mxu0 0.0
      %1647 = vmatprep.subr.mxu0 0.0
      %1648 = vmatpush1.msra.mxu0 0.0
      %1649 = vmatprep.subr.mxu0 0.0
      %1650 = vmatpush1.msra.mxu0 0.0
      %1651 = vmatprep.subr.mxu0 0.0
      %1652 = vmatpush1.msra.mxu0 0.0
      %1653 = vmatprep.subr.mxu0 0.0
      %1654 = vmatpush1.msra.mxu0 0.0
      %1655 = vmatprep.subr.mxu0 0.0
      %1656 = vmatpush1.msra.mxu0 0.0
      %1657 = vmatprep.subr.mxu0 0.0
      %1658 = vmatpush1.msra.mxu0 0.0
      %1659 = vmatprep.subr.mxu0 0.0
      %1660 = vmatpush1.msra.mxu0 0.0
      %1661 = vmatprep.subr.mxu0 0.0
      %1662 = vmatpush1.msra.mxu0 0.0
      %1663 = vmatprep.subr.mxu0 0.0
      %1664 = vmatpush1.msra.mxu0 0.0
      %1665 = vmatprep.subr.mxu0 0.0
      %1666 = vmatpush1.msra.mxu0 0.0
      %1667 = vmatprep.subr.mxu0 0.0
      %1668 = vmatpush1.msra.mxu0 0.0
      %1669 = vmatprep.subr.mxu0 0.0
      %1670 = vmatpush1.msra.mxu0 0.0
      %1671 = vmatprep.subr.mxu0 0.0
      %1672 = vmatpush1.msra.mxu0 0.0
      %1673 = vmatprep.subr.mxu0 0.0
      %1674 = vmatpush1.msra.mxu0 0.0
      %1675 = vmatprep.subr.mxu0 0.0
      %1676 = vmatpush1.msra.mxu0 0.0
      %1677 = vmatprep.subr.mxu0 0.0
      %1678 = vmatpush1.msra.mxu0 0.0
      %1679 = vmatprep.subr.mxu0 0.0
      %1680 = vmatpush1.msra.mxu0 0.0
      %1681 = vmatprep.subr.mxu0 0.0
      %1682 = vmatpush1.msra.mxu0 0.0
      %1683 = vmatprep.subr.mxu0 0.0
      %1684 = vmatpush1.msra.mxu0 0.0
      %1685 = vmatprep.subr.mxu0 0.0
      %1686 = vmatpush1.msra.mxu0 0.0
      %1687 = vmatprep.mubr.f32.mxu0 0.0
      %1688 = vmatmul.mubr.f32.gmra.mrb[0].mxu0 %v754
      %v1689 = vpop.f32.mrb[0].mxu0
      %v1690 = vadd.f32 %v752, %v1689
      %v1691 = vpop.f32.mrb[0].mxu0
      %v1692 = vadd.f32 %v752, %v1691
      %1693 = vdwg.mxu0
      %v1694 = vmax.f32 %v1690, 0.0
      %v1695 = vmax.f32 %v1692, 0.0
      %v1697 = vsel %vm444, %v1694, 0
      %v1700 = vsel %vm444, %v1695, 0
      %1702 = vmatprep.subr.mxu0 %v1700
      %1703 = vmatpush1.msra.mxu0 %v1697
      %1704 = vmatprep.subr.mxu0 0.0
      %1705 = vmatpush1.msra.mxu0 0.0
      %1706 = vmatprep.subr.mxu0 0.0
      %1707 = vmatpush1.msra.mxu0 0.0
      %1708 = vmatprep.subr.mxu0 0.0
      %1709 = vmatpush1.msra.mxu0 0.0
      %1710 = vmatprep.subr.mxu0 0.0
      %1711 = vmatpush1.msra.mxu0 0.0
      %1712 = vmatprep.subr.mxu0 0.0
      %1713 = vmatpush1.msra.mxu0 0.0
      %1714 = vmatprep.subr.mxu0 0.0
      %1715 = vmatpush1.msra.mxu0 0.0
      %1716 = vmatprep.subr.mxu0 0.0
      %1717 = vmatpush1.msra.mxu0 0.0
      %1718 = vmatprep.subr.mxu0 0.0
      %1719 = vmatpush1.msra.mxu0 0.0
      %1720 = vmatprep.subr.mxu0 0.0
      %1721 = vmatpush1.msra.mxu0 0.0
      %1722 = vmatprep.subr.mxu0 0.0
      %1723 = vmatpush1.msra.mxu0 0.0
      %1724 = vmatprep.subr.mxu0 0.0
      %1725 = vmatpush1.msra.mxu0 0.0
      %1726 = vmatprep.subr.mxu0 0.0
      %1727 = vmatpush1.msra.mxu0 0.0
      %1728 = vmatprep.subr.mxu0 0.0
      %1729 = vmatpush1.msra.mxu0 0.0
      %1730 = vmatprep.subr.mxu0 0.0
      %1731 = vmatpush1.msra.mxu0 0.0
      %1732 = vmatprep.subr.mxu0 0.0
      %1733 = vmatpush1.msra.mxu0 0.0
      %1734 = vmatprep.subr.mxu0 0.0
      %1735 = vmatpush1.msra.mxu0 0.0
      %1736 = vmatprep.subr.mxu0 0.0
      %1737 = vmatpush1.msra.mxu0 0.0
      %1738 = vmatprep.subr.mxu0 0.0
      %1739 = vmatpush1.msra.mxu0 0.0
      %1740 = vmatprep.subr.mxu0 0.0
      %1741 = vmatpush1.msra.mxu0 0.0
      %1742 = vmatprep.subr.mxu0 0.0
      %1743 = vmatpush1.msra.mxu0 0.0
      %1744 = vmatprep.subr.mxu0 0.0
      %1745 = vmatpush1.msra.mxu0 0.0
      %1746 = vmatprep.subr.mxu0 0.0
      %1747 = vmatpush1.msra.mxu0 0.0
      %1748 = vmatprep.subr.mxu0 0.0
      %1749 = vmatpush1.msra.mxu0 0.0
      %1750 = vmatprep.subr.mxu0 0.0
      %1751 = vmatpush1.msra.mxu0 0.0
      %1752 = vmatprep.subr.mxu0 0.0
      %1753 = vmatpush1.msra.mxu0 0.0
      %1754 = vmatprep.subr.mxu0 0.0
      %1755 = vmatpush1.msra.mxu0 0.0
      %1756 = vmatprep.subr.mxu0 0.0
      %1757 = vmatpush1.msra.mxu0 0.0
      %1758 = vmatprep.subr.mxu0 0.0
      %1759 = vmatpush1.msra.mxu0 0.0
      %1760 = vmatprep.subr.mxu0 0.0
      %1761 = vmatpush1.msra.mxu0 0.0
      %1762 = vmatprep.subr.mxu0 0.0
      %1763 = vmatpush1.msra.mxu0 0.0
      %1764 = vmatprep.subr.mxu0 0.0
      %1765 = vmatpush1.msra.mxu0 0.0
      %1766 = vmatprep.mubr.f32.mxu0 0.0
      %1767 = vmatmul.mubr.f32.gmra.mrb[0].mxu0 %v839
      %v1768 = vpop.f32.mrb[0].mxu0
      %v1769 = vadd.f32 %v832, %v1768
      %v1770 = vpop.f32.mrb[0].mxu0
      %v1771 = vadd.f32 %v832, %v1770
      %1772 = vmatprep.mubr.f32.mxu0 0.0
      %1773 = vmatmul.mubr.f32.gmra.mrb[0].mxu0 %v841
      %v1774 = vpop.f32.mrb[0].mxu0
      %v1775 = vadd.f32 %v837, %v1774
      %v1776 = vpop.f32.mrb[0].mxu0
      %v1777 = vadd.f32 %v837, %v1776
      %1778 = vdwg.mxu0
      %v1779 = vadd.f32 %v1619, %v1620
      %1780 = vadd.xlane.f32.xlu0 %v1779
      %v1781 = vpop.xlane.xlu0 %1780
      %v1782 = vadd.f32 %v1621, %v1622
      %1783 = vadd.xlane.f32.xlu0 %v1782
      %v1784 = vpop.xlane.xlu0 %1783
      %v1785 = vmul.f32 %v1781, 0.00390625
      %v1786 = vmul.f32 %v1784, 0.00390625
      %1787 = vmatprep.subr.mxu0 0.0
      %1788 = vmatpush1.msra.mxu0 %v1785
      %1789 = vmatprep.subr.mxu0 0.0
      %1790 = vmatpush1.msra.mxu0 %v1786
      %1791 = vmatprep.subr.mxu0 0.0
      %1792 = vmatpush1.msra.mxu0 0.0
      %1793 = vmatprep.subr.mxu0 0.0
      %1794 = vmatpush1.msra.mxu0 0.0
      %1795 = vmatprep.subr.mxu0 0.0
      %1796 = vmatpush1.msra.mxu0 0.0
      %1797 = vmatprep.subr.mxu0 0.0
      %1798 = vmatpush1.msra.mxu0 0.0
      %1799 = vmatprep.subr.mxu0 0.0
      %1800 = vmatpush1.msra.mxu0 0.0
      %1801 = vmatprep.subr.mxu0 0.0
      %1802 = vmatpush1.msra.mxu0 0.0
      %1803 = vmatprep.subr.mxu0 0.0
      %1804 = vmatpush1.msra.mxu0 0.0
      %1805 = vmatprep.subr.mxu0 0.0
      %1806 = vmatpush1.msra.mxu0 0.0
      %1807 = vmatprep.subr.mxu0 0.0
      %1808 = vmatpush1.msra.mxu0 0.0
      %1809 = vmatprep.subr.mxu0 0.0
      %1810 = vmatpush1.msra.mxu0 0.0
      %1811 = vmatprep.subr.mxu0 0.0
      %1812 = vmatpush1.msra.mxu0 0.0
      %1813 = vmatprep.subr.mxu0 0.0
      %1814 = vmatpush1.msra.mxu0 0.0
      %1815 = vmatprep.subr.mxu0 0.0
      %1816 = vmatpush1.msra.mxu0 0.0
      %1817 = vmatprep.subr.mxu0 0.0
      %1818 = vmatpush1.msra.mxu0 0.0
      %1819 = vmatprep.subr.mxu0 0.0
      %1820 = vmatpush1.msra.mxu0 0.0
      %1821 = vmatprep.subr.mxu0 0.0
      %1822 = vmatpush1.msra.mxu0 0.0
      %1823 = vmatprep.subr.mxu0 0.0
      %1824 = vmatpush1.msra.mxu0 0.0
      %1825 = vmatprep.subr.mxu0 0.0
      %1826 = vmatpush1.msra.mxu0 0.0
      %1827 = vmatprep.subr.mxu0 0.0
      %1828 = vmatpush1.msra.mxu0 0.0
      %1829 = vmatprep.subr.mxu0 0.0
      %1830 = vmatpush1.msra.mxu0 0.0
      %1831 = vmatprep.subr.mxu0 0.0
      %1832 = vmatpush1.msra.mxu0 0.0
      %1833 = vmatprep.subr.mxu0 0.0
      %1834 = vmatpush1.msra.mxu0 0.0
      %1835 = vmatprep.subr.mxu0 0.0
      %1836 = vmatpush1.msra.mxu0 0.0
      %1837 = vmatprep.subr.mxu0 0.0
      %1838 = vmatpush1.msra.mxu0 0.0
      %1839 = vmatprep.subr.mxu0 0.0
      %1840 = vmatpush1.msra.mxu0 0.0
      %1841 = vmatprep.subr.mxu0 0.0
      %1842 = vmatpush1.msra.mxu0 0.0
      %1843 = vmatprep.subr.mxu0 0.0
      %1844 = vmatpush1.msra.mxu0 0.0
      %1845 = vmatprep.subr.mxu0 0.0
      %1846 = vmatpush1.msra.mxu0 0.0
      %1847 = vmatprep.subr.mxu0 0.0
      %1848 = vmatpush1.msra.mxu0 0.0
      %1849 = vmatprep.subr.mxu0 0.0
      %1850 = vmatpush1.msra.mxu0 0.0
      %1851 = vmatprep.mubr.f32.mxu0 0.0
      %1852 = vmatmul.mubr.f32.gmra.mrb[0].mxu0 %v540
      %v1853 = vpop.f32.mrb[0].mxu0
      %v1854 = vadd.f32 %v538, %v1853
      %v1855 = vpop.f32.mrb[0].mxu0
      %1856 = vdwg.mxu0
      %v1857 = vmax.f32 %v1854, 0.0
      %v1859 = vsel %vm444, %v1857, 0
      %1861 = vmatprep.subr.mxu0 0.0
      %1862 = vmatpush1.msra.mxu0 %v1859
      %1863 = vmatprep.subr.mxu0 0.0
      %1864 = vmatpush1.msra.mxu0 0.0
      %1865 = vmatprep.subr.mxu0 0.0
      %1866 = vmatpush1.msra.mxu0 0.0
      %1867 = vmatprep.subr.mxu0 0.0
      %1868 = vmatpush1.msra.mxu0 0.0
      %1869 = vmatprep.subr.mxu0 0.0
      %1870 = vmatpush1.msra.mxu0 0.0
      %1871 = vmatprep.subr.mxu0 0.0
      %1872 = vmatpush1.msra.mxu0 0.0
      %1873 = vmatprep.subr.mxu0 0.0
      %1874 = vmatpush1.msra.mxu0 0.0
      %1875 = vmatprep.subr.mxu0 0.0
      %1876 = vmatpush1.msra.mxu0 0.0
      %1877 = vmatprep.subr.mxu0 0.0
      %1878 = vmatpush1.msra.mxu0 0.0
      %1879 = vmatprep.subr.mxu0 0.0
      %1880 = vmatpush1.msra.mxu0 0.0
      %1881 = vmatprep.subr.mxu0 0.0
      %1882 = vmatpush1.msra.mxu0 0.0
      %1883 = vmatprep.subr.mxu0 0.0
      %1884 = vmatpush1.msra.mxu0 0.0
      %1885 = vmatprep.subr.mxu0 0.0
      %1886 = vmatpush1.msra.mxu0 0.0
      %1887 = vmatprep.subr.mxu0 0.0
      %1888 = vmatpush1.msra.mxu0 0.0
      %1889 = vmatprep.subr.mxu0 0.0
      %1890 = vmatpush1.msra.mxu0 0.0
      %1891 = vmatprep.subr.mxu0 0.0
      %1892 = vmatpush1.msra.mxu0 0.0
      %1893 = vmatprep.subr.mxu0 0.0
      %1894 = vmatpush1.msra.mxu0 0.0
      %1895 = vmatprep.subr.mxu0 0.0
      %1896 = vmatpush1.msra.mxu0 0.0
      %1897 = vmatprep.subr.mxu0 0.0
      %1898 = vmatpush1.msra.mxu0 0.0
      %1899 = vmatprep.subr.mxu0 0.0
      %1900 = vmatpush1.msra.mxu0 0.0
      %1901 = vmatprep.subr.mxu0 0.0
      %1902 = vmatpush1.msra.mxu0 0.0
      %1903 = vmatprep.subr.mxu0 0.0
      %1904 = vmatpush1.msra.mxu0 0.0
      %1905 = vmatprep.subr.mxu0 0.0
      %1906 = vmatpush1.msra.mxu0 0.0
      %1907 = vmatprep.subr.mxu0 0.0
      %1908 = vmatpush1.msra.mxu0 0.0
      %1909 = vmatprep.subr.mxu0 0.0
      %1910 = vmatpush1.msra.mxu0 0.0
      %1911 = vmatprep.subr.mxu0 0.0
      %1912 = vmatpush1.msra.mxu0 0.0
      %1913 = vmatprep.subr.mxu0 0.0
      %1914 = vmatpush1.msra.mxu0 0.0
      %1915 = vmatprep.subr.mxu0 0.0
      %1916 = vmatpush1.msra.mxu0 0.0
      %1917 = vmatprep.subr.mxu0 0.0
      %1918 = vmatpush1.msra.mxu0 0.0
      %1919 = vmatprep.subr.mxu0 0.0
      %1920 = vmatpush1.msra.mxu0 0.0
      %1921 = vmatprep.subr.mxu0 0.0
      %1922 = vmatpush1.msra.mxu0 0.0
      %1923 = vmatprep.subr.mxu0 0.0
      %1924 = vmatpush1.msra.mxu0 0.0
      %1925 = vmatprep.mubr.f32.mxu0 0.0
      %1926 = vmatmul.mubr.f32.gmra.mrb[0].mxu0 %v621
      %v1927 = vpop.f32.mrb[0].mxu0
      %v1928 = vadd.f32 %v616, %v1927
      %v1929 = vpop.f32.mrb[0].mxu0
      %1930 = vmatprep.mubr.f32.mxu0 0.0
      %1931 = vmatmul.mubr.f32.gmra.mrb[0].mxu0 %v623
      %v1932 = vpop.f32.mrb[0].mxu0
      %v1933 = vadd.f32 %v618, %v1932
      %v1934 = vpop.f32.mrb[0].mxu0
      %1935 = vdwg.mxu0
      %1937 = vset.pattern.permute.xlu0 0
      %1938 = vperm.xlu0 %1937, %v1928
      %v1939 = vpop.permute.xlu0 %1938
      %1942 = vset.pattern.permute.xlu0 0
      %1943 = vperm.xlu0 %1942, %v1933
      %v1944 = vpop.permute.xlu0 %1943
      %v1946 = vadd.f32 %v1769, %v1939
      %v1947 = vadd.f32 %v1771, %v1939
      %v1948 = vadd.f32 %v1775, %v1944
      %v1949 = vadd.f32 %v1777, %v1944
      %v1950 = vmul.f32 %v1946, 0.5
      %v1951 = vmul.f32 %v1947, 0.5
      %v1952 = vmul.f32 %v1948, 0.5
      %v1953 = vmul.f32 %v1949, 0.5
      %v1954 = vtanh.pop %v1950
      %v1955 = vtanh.pop %v1951
      %v1956 = vtanh.pop %v1952
      %v1957 = vtanh.pop %v1953
      %v1958 = vadd.f32 %v1954, 1.0
      %v1959 = vadd.f32 %v1955, 1.0
      %v1960 = vadd.f32 %v1956, 1.0
      %v1961 = vadd.f32 %v1957, 1.0
      %v1962 = vmul.f32 %v1958, 0.5
      %v1963 = vmul.f32 %v1959, 0.5
      %v1964 = vmul.f32 %v1960, 0.5
      %v1965 = vmul.f32 %v1961, 0.5
      %v1966 = vmul.f32 %v1238, %v1962
      %v1967 = vmul.f32 %v1240, %v1963
      %v1968 = vmul.f32 %v1244, %v1964
      %v1969 = vmul.f32 %v1246, %v1965
      %v1970 = vsub.f32 1.0, %v1962
      %v1971 = vsub.f32 1.0, %v1963
      %v1972 = vsub.f32 1.0, %v1964
      %v1973 = vsub.f32 1.0, %v1965
      %v1974 = vmul.f32 %v1250, %v1970
      %v1975 = vmul.f32 %v1252, %v1971
      %v1976 = vmul.f32 %v1256, %v1972
      %v1977 = vmul.f32 %v1258, %v1973
      %v1978 = vadd.f32 %v1966, %v1974
      %v1979 = vadd.f32 %v1967, %v1975
      %v1980 = vadd.f32 %v1968, %v1976
      %v1981 = vadd.f32 %v1969, %v1977
      %s1982 = scalar_lea.vmem %s202, 32
      %1983 = vst [vmem:[%s1982] sm:$0xff] %v1978
      %1984 = vst [vmem:[%s1982 + $0x8] sm:$0xff] %v1979
      %1985 = vst [vmem:[%s1982 + $0x10] sm:$0xff] %v1980
      %1986 = vst [vmem:[%s1982 + $0x18] sm:$0xff] %v1981
      %s1987 = smul.u32 2, %s14
      %p1988 = scmp.lt.s32.totalorder %s1987, 3
      %s1989 = scalar_select %p1988, %s1987, 3
      %s1990 = smul.addr %s1989, 4
      %s1991 = smul.addr %s1990, 8
      %s1992 = scalar_lea.vmem %s3, %s1991
      // Predicated region
      $region33: #{iaff_forward.1} parent=31 // pred_check
        %p1993 = pneg %p105
      $region34: #{iaff_forward.1} parent=31 // pred_check_branch
        %1995 = sbr.rel (%p1993) target = $region36
      $region35: #{iaff_forward.1} parent=31 // pred_region
        %s1996 = smul.u32 2, %s14
      $region36: #{iaff_forward.1} parent=31 // pred_fallthru
        _
    $region32: #{iaff_forward.1} parent=5 // pred_fallthru
      _
    %p1997 = scmp.le.s32.totalorder 2, %s9
    // Predicated region
    $region37: #{iaff_forward.1} parent=5 // pred_check
      %p1998 = pneg %p1997
    $region38: #{iaff_forward.1} parent=5 // pred_check_branch
      %2000 = sbr.rel (%p1998) target = $region40
    $region39: #{iaff_forward.1} parent=5 // pred_region
      %s2001 = ssub.s32 %s9, 2
      // Predicated region
      $region41: #{iaff_forward.1} parent=39 // pred_check
        %p2002 = pneg %p111
      $region42: #{iaff_forward.1} parent=39 // pred_check_branch
        %2004 = sbr.rel (%p2002) target = $region44
      $region43: #{iaff_forward.1} parent=39 // pred_region
        %s2005 = smul.u32 2, %s15
        %p2006 = scmp.lt.s32.totalorder %s2005, 3
        %s2007 = scalar_select %p2006, %s2005, 3
        %s2008 = smul.addr %s2007, 4
        %s2009 = smul.addr %s2008, 8
        %s2010 = scalar_lea.vmem %s3, %s2009
      $region44: #{iaff_forward.1} parent=39 // pred_fallthru
        _
    $region40: #{iaff_forward.1} parent=5 // pred_fallthru
      _
  $region6: #{iaff_forward.1} parent=0 // loop_footer
    %s13 = sadd.s32 1, %s9
  $region7: #{iaff_forward.1} parent=0 // loop_footer_branch
    %8 = sbr.rel target = $region3
  $region8: #{iaff_forward.1} parent=0 // loop_exit
    _

</llo_original>
